<compile_context>
chip_gen: v7x
topology: tpu7x:2x2x1
jax: 0.10.0
libtpu: 0.0.40
codegen_flags: <defaults>
</compile_context>

<pallas_src>
import functools

import jax
import jax.numpy as jnp
from jax.experimental import pallas as pl
from jax.experimental.pallas import tpu as pltpu

KH = KW = 2   # conv kernel size
PAD = 1       # conv padding


def _round_up(v, m):
  return (v + m - 1) // m * m


def _accumulate_taps(load_chan, wts, accs):
  """accs[co] += sum_{ci,ky,kx} wts[co][ci][ky][kx] * canvas_ci[y+ky-1, x+kx-1].

  Each canvas holds its (unpadded) data at the origin of an (hh, wl) zero
  field, so the padding=1 convolution becomes taps at offsets {-1, 0},
  realised with pltpu.roll (XLU slot, off the VALU critical path).  Wrapped
  rows/columns (row hh-1 / lane wl-1) are zero by construction on both
  canvases, so wraparound never pollutes the region that is kept.  Channels
  are loaded one at a time from VMEM to bound the live vreg set.
  """
  cout = len(wts)
  cin = len(wts[0])
  for ci in range(cin):
    base = load_chan(ci)                       # (hh, wl), just-in-time load
    # (ky, kx) = (1, 1)  -> offset (0, 0)
    for co in range(cout):
      accs[co] = accs[co] + wts[co][ci][1][1] * base
    # (1, 0) -> offset (0, -1)
    s = pltpu.roll(base, shift=1, axis=1)
    for co in range(cout):
      accs[co] = accs[co] + wts[co][ci][1][0] * s
    # (0, 1) -> offset (-1, 0)
    r = pltpu.roll(base, shift=1, axis=0)
    for co in range(cout):
      accs[co] = accs[co] + wts[co][ci][0][1] * r
    # (0, 0) -> offset (-1, -1): reuse the row-rolled copy (3 rolls/ci, not 4)
    s = pltpu.roll(r, shift=1, axis=1)
    for co in range(cout):
      accs[co] = accs[co] + wts[co][ci][0][0] * s
  return accs


def _model_kernel(w_ref, b_ref, x_ref, o_ref, xcan_ref, t4_ref, *,
                  cin, cout, h, w, h1, w1, h2, w2):
  hh, wl = xcan_ref.shape[1], xcan_ref.shape[2]

  # ---- scalar (SMEM) reads, hoisted once and shared by both convolutions.
  #      conv #2's weights absorb the hardswish 1/6 at scalar cost. ----
  wts1 = [[[[w_ref[((co * cin + ci) * KH + ky) * KW + kx]
             for kx in range(KW)] for ky in range(KH)]
           for ci in range(cin)] for co in range(cout)]
  inv6 = jnp.float32(1.0 / 6.0)
  wts2 = [[[[wts1[co][ci][ky][kx] * inv6
             for kx in range(KW)] for ky in range(KH)]
           for ci in range(cin)] for co in range(cout)]
  bias = [b_ref[co] for co in range(cout)]

  # ---- build the zero-padded input canvases in VMEM (image at the origin;
  #      the zero border doubles as the conv padding via the wraparound taps).
  #      Re-zeroed every step so the kernel is megacore/grid-split safe. ----
  xcan_ref[...] = jnp.zeros_like(xcan_ref)
  for ci in range(cin):
    xcan_ref[ci, 0:h, 0:w] = x_ref[0, ci].astype(jnp.float32)

  # ---- conv #1 (accumulators start at the bias splat) ----
  acc1 = [jnp.full((hh, wl), bias[co], jnp.float32) for co in range(cout)]
  acc1 = _accumulate_taps(lambda ci: xcan_ref[ci], wts1, acc1)

  # ---- t4 = t1 * clamp(t1 + 3, 0, 6), masked to the valid (h1, w1) region
  #      (the /6 is folded into wts2).  The masked canvas is conv #2's
  #      zero-padded input; staged through VMEM so conv #2 reloads one
  #      channel at a time instead of keeping all three in registers. ----
  row = jax.lax.broadcasted_iota(jnp.int32, (hh, wl), 0)
  col = jax.lax.broadcasted_iota(jnp.int32, (hh, wl), 1)
  mask = jnp.where((row < h1) & (col < w1), 1.0, 0.0)   # built once, reused
  for co in range(cout):
    t1 = acc1[co]
    t4_ref[co] = (t1 * jnp.clip(t1 + 3.0, 0.0, 6.0)) * mask

  # ---- conv #2 ----
  acc2 = [jnp.full((hh, wl), bias[co], jnp.float32) for co in range(cout)]
  acc2 = _accumulate_taps(lambda ci: t4_ref[ci], wts2, acc2)

  # ---- exact-size output block (masked vst; no separate slice pass) ----
  for co in range(cout):
    o_ref[0, co] = acc2[co][0:h2, 0:w2].astype(o_ref.dtype)


def model_forward(x, w, b):
  """x: (N, cin, H, W); w: (cout, cin, 2, 2); b: (cout,). Returns (N, cout, H+2, W+2)."""
  n, cin, h, wdim = x.shape
  cout = w.shape[0]
  h1, w1 = h + 2 * PAD - KH + 1, wdim + 2 * PAD - KW + 1      # after conv1
  h2, w2 = h1 + 2 * PAD - KH + 1, w1 + 2 * PAD - KW + 1       # after conv2

  # Lane-dense canvas (sublanes multiple of 8, lanes multiple of 128).
  hh = _round_up(h2, 8)
  wl = _round_up(w2, 128)
  # Wraparound safety of the roll-based taps: the wrapped row/lane must fall
  # inside each canvas's zero border.
  assert hh >= h + 1 and wl >= wdim + 1, "conv #1 wrap would read image data"
  assert hh >= h1 + 1 and wl >= w1 + 1, "conv #2 wrap would read valid t4 data"
  assert hh >= h2 and wl >= w2, "output does not fit the canvas"

  w_flat = w.reshape(-1).astype(jnp.float32)
  b_flat = b.astype(jnp.float32)

  kernel = functools.partial(_model_kernel, cin=cin, cout=cout,
                             h=h, w=wdim, h1=h1, w1=w1, h2=h2, w2=w2)

  itemsize = x.dtype.itemsize
  flops = 2 * n * 2 * cin * cout * KH * KW * hh * wl   # 2 convs, mul+add
  bytes_accessed = x.size * itemsize + n * cout * h2 * w2 * itemsize

  return pl.pallas_call(
      kernel,
      out_shape=jax.ShapeDtypeStruct((n, cout, h2, w2), x.dtype),
      grid_spec=pltpu.PrefetchScalarGridSpec(
          num_scalar_prefetch=2,                 # w_flat, b_flat -> SMEM
          grid=(n,),
          in_specs=[
              # Raw, unpadded image; last two block dims equal the array dims.
              pl.BlockSpec((1, cin, h, wdim), lambda i, wref, bref: (i, 0, 0, 0)),
          ],
          # Exact-size output block; last two block dims equal the array dims.
          out_specs=pl.BlockSpec((1, cout, h2, w2),
                                 lambda i, wref, bref: (i, 0, 0, 0)),
          scratch_shapes=[
              pltpu.VMEM((cin, hh, wl), jnp.float32),   # zero-padded x canvas
              pltpu.VMEM((cout, hh, wl), jnp.float32),  # masked hardswish canvas
          ]),
      compiler_params=pltpu.CompilerParams(
          # One image per grid step; "parallel" lets megacore / v7x dual-TC
          # split the batch.
          # TODO(synk): on v7x, verify the grid actually splits across the two
          # TensorCores and switch to pltpu.CORE_PARALLEL if it does not.
          dimension_semantics=("parallel",)),
      cost_estimate=pl.CostEstimate(
          flops=flops, transcendentals=0, bytes_accessed=bytes_accessed),
  )(w_flat, b_flat, x)


def _reference(x, w, b):
  def conv(v):
    out = jax.lax.conv_general_dilated(
        v, w, window_strides=(1, 1), padding=((PAD, PAD), (PAD, PAD)),
        dimension_numbers=("NCHW", "OIHW", "NCHW"))
    return out + b[None, :, None, None]
  t1 = conv(x)
  t5 = t1 * jnp.clip(t1 + 3.0, 0.0, 6.0) / 6.0
  return conv(t5)


if __name__ == "__main__":
  key = jax.random.PRNGKey(0)
  kx, kw, kb = jax.random.split(key, 3)

  # Shapes of the original module: x1 = torch.randn(2, 3, 64, 64); Conv2d(3,3,2,p=1).
  x = jax.random.normal(kx, (2, 3, 64, 64), dtype=jnp.float32)
  w = jax.random.normal(kw, (3, 3, KH, KW), dtype=jnp.float32) * 0.5
  b = jax.random.normal(kb, (3,), dtype=jnp.float32) * 0.1

  out = jax.block_until_ready(model_forward(x, w, b))
  assert out.shape == (2, 3, 66, 66), out.shape

  ref = _reference(x, w, b)
  err = float(jnp.max(jnp.abs(out - ref)))
  assert jnp.allclose(out, ref, rtol=1e-4, atol=1e-4), err

  print("KERNEL_OK")
</pallas_src>

<mosaic_0001>
module attributes {stable_mosaic.version = 11 : i64} {
  func.func @_model_kernel(%arg0: i32, %arg1: memref<36xf32, #tpu.memory_space<smem>>, %arg2: memref<3xf32, #tpu.memory_space<smem>>, %arg3: memref<1x3x64x64xf32, #tpu.memory_space<vmem>>, %arg4: memref<1x3x66x66xf32, #tpu.memory_space<vmem>>, %arg5: memref<3x72x128xf32, #tpu.memory_space<vmem>>, %arg6: memref<3x72x128xf32, #tpu.memory_space<vmem>>) attributes {dimension_semantics = [#tpu.dimension_semantics<parallel>], iteration_bounds = array<i64: 2>, scalar_prefetch = 2 : i64, scratch_operands = 2 : i64, tpu.core_type = #tpu.core_type<tc>, window_params = [{transform_indices = @transform_0, window_bounds = array<i64: 1, 3, 64, 64>}, {transform_indices = @transform_1, window_bounds = array<i64: 1, 3, 66, 66>}]} {
    %c0 = arith.constant 0 : index
    %0 = memref.load %arg1[%c0] : memref<36xf32, #tpu.memory_space<smem>>
    %c1 = arith.constant 1 : index
    %1 = memref.load %arg1[%c1] : memref<36xf32, #tpu.memory_space<smem>>
    %c2 = arith.constant 2 : index
    %2 = memref.load %arg1[%c2] : memref<36xf32, #tpu.memory_space<smem>>
    %c3 = arith.constant 3 : index
    %3 = memref.load %arg1[%c3] : memref<36xf32, #tpu.memory_space<smem>>
    %c4 = arith.constant 4 : index
    %4 = memref.load %arg1[%c4] : memref<36xf32, #tpu.memory_space<smem>>
    %c5 = arith.constant 5 : index
    %5 = memref.load %arg1[%c5] : memref<36xf32, #tpu.memory_space<smem>>
    %c6 = arith.constant 6 : index
    %6 = memref.load %arg1[%c6] : memref<36xf32, #tpu.memory_space<smem>>
    %c7 = arith.constant 7 : index
    %7 = memref.load %arg1[%c7] : memref<36xf32, #tpu.memory_space<smem>>
    %c8 = arith.constant 8 : index
    %8 = memref.load %arg1[%c8] : memref<36xf32, #tpu.memory_space<smem>>
    %c9 = arith.constant 9 : index
    %9 = memref.load %arg1[%c9] : memref<36xf32, #tpu.memory_space<smem>>
    %c10 = arith.constant 10 : index
    %10 = memref.load %arg1[%c10] : memref<36xf32, #tpu.memory_space<smem>>
    %c11 = arith.constant 11 : index
    %11 = memref.load %arg1[%c11] : memref<36xf32, #tpu.memory_space<smem>>
    %c12 = arith.constant 12 : index
    %12 = memref.load %arg1[%c12] : memref<36xf32, #tpu.memory_space<smem>>
    %c13 = arith.constant 13 : index
    %13 = memref.load %arg1[%c13] : memref<36xf32, #tpu.memory_space<smem>>
    %c14 = arith.constant 14 : index
    %14 = memref.load %arg1[%c14] : memref<36xf32, #tpu.memory_space<smem>>
    %c15 = arith.constant 15 : index
    %15 = memref.load %arg1[%c15] : memref<36xf32, #tpu.memory_space<smem>>
    %c16 = arith.constant 16 : index
    %16 = memref.load %arg1[%c16] : memref<36xf32, #tpu.memory_space<smem>>
    %c17 = arith.constant 17 : index
    %17 = memref.load %arg1[%c17] : memref<36xf32, #tpu.memory_space<smem>>
    %c18 = arith.constant 18 : index
    %18 = memref.load %arg1[%c18] : memref<36xf32, #tpu.memory_space<smem>>
    %c19 = arith.constant 19 : index
    %19 = memref.load %arg1[%c19] : memref<36xf32, #tpu.memory_space<smem>>
    %c20 = arith.constant 20 : index
    %20 = memref.load %arg1[%c20] : memref<36xf32, #tpu.memory_space<smem>>
    %c21 = arith.constant 21 : index
    %21 = memref.load %arg1[%c21] : memref<36xf32, #tpu.memory_space<smem>>
    %c22 = arith.constant 22 : index
    %22 = memref.load %arg1[%c22] : memref<36xf32, #tpu.memory_space<smem>>
    %c23 = arith.constant 23 : index
    %23 = memref.load %arg1[%c23] : memref<36xf32, #tpu.memory_space<smem>>
    %c24 = arith.constant 24 : index
    %24 = memref.load %arg1[%c24] : memref<36xf32, #tpu.memory_space<smem>>
    %c25 = arith.constant 25 : index
    %25 = memref.load %arg1[%c25] : memref<36xf32, #tpu.memory_space<smem>>
    %c26 = arith.constant 26 : index
    %26 = memref.load %arg1[%c26] : memref<36xf32, #tpu.memory_space<smem>>
    %c27 = arith.constant 27 : index
    %27 = memref.load %arg1[%c27] : memref<36xf32, #tpu.memory_space<smem>>
    %c28 = arith.constant 28 : index
    %28 = memref.load %arg1[%c28] : memref<36xf32, #tpu.memory_space<smem>>
    %c29 = arith.constant 29 : index
    %29 = memref.load %arg1[%c29] : memref<36xf32, #tpu.memory_space<smem>>
    %c30 = arith.constant 30 : index
    %30 = memref.load %arg1[%c30] : memref<36xf32, #tpu.memory_space<smem>>
    %c31 = arith.constant 31 : index
    %31 = memref.load %arg1[%c31] : memref<36xf32, #tpu.memory_space<smem>>
    %c32 = arith.constant 32 : index
    %32 = memref.load %arg1[%c32] : memref<36xf32, #tpu.memory_space<smem>>
    %c33 = arith.constant 33 : index
    %33 = memref.load %arg1[%c33] : memref<36xf32, #tpu.memory_space<smem>>
    %c34 = arith.constant 34 : index
    %34 = memref.load %arg1[%c34] : memref<36xf32, #tpu.memory_space<smem>>
    %c35 = arith.constant 35 : index
    %35 = memref.load %arg1[%c35] : memref<36xf32, #tpu.memory_space<smem>>
    %cst = arith.constant 0.166666672 : f32
    %36 = arith.mulf %0, %cst : f32
    %cst_0 = arith.constant 0.166666672 : f32
    %37 = arith.mulf %1, %cst_0 : f32
    %cst_1 = arith.constant 0.166666672 : f32
    %38 = arith.mulf %2, %cst_1 : f32
    %cst_2 = arith.constant 0.166666672 : f32
    %39 = arith.mulf %3, %cst_2 : f32
    %cst_3 = arith.constant 0.166666672 : f32
    %40 = arith.mulf %4, %cst_3 : f32
    %cst_4 = arith.constant 0.166666672 : f32
    %41 = arith.mulf %5, %cst_4 : f32
    %cst_5 = arith.constant 0.166666672 : f32
    %42 = arith.mulf %6, %cst_5 : f32
    %cst_6 = arith.constant 0.166666672 : f32
    %43 = arith.mulf %7, %cst_6 : f32
    %cst_7 = arith.constant 0.166666672 : f32
    %44 = arith.mulf %8, %cst_7 : f32
    %cst_8 = arith.constant 0.166666672 : f32
    %45 = arith.mulf %9, %cst_8 : f32
    %cst_9 = arith.constant 0.166666672 : f32
    %46 = arith.mulf %10, %cst_9 : f32
    %cst_10 = arith.constant 0.166666672 : f32
    %47 = arith.mulf %11, %cst_10 : f32
    %cst_11 = arith.constant 0.166666672 : f32
    %48 = arith.mulf %12, %cst_11 : f32
    %cst_12 = arith.constant 0.166666672 : f32
    %49 = arith.mulf %13, %cst_12 : f32
    %cst_13 = arith.constant 0.166666672 : f32
    %50 = arith.mulf %14, %cst_13 : f32
    %cst_14 = arith.constant 0.166666672 : f32
    %51 = arith.mulf %15, %cst_14 : f32
    %cst_15 = arith.constant 0.166666672 : f32
    %52 = arith.mulf %16, %cst_15 : f32
    %cst_16 = arith.constant 0.166666672 : f32
    %53 = arith.mulf %17, %cst_16 : f32
    %cst_17 = arith.constant 0.166666672 : f32
    %54 = arith.mulf %18, %cst_17 : f32
    %cst_18 = arith.constant 0.166666672 : f32
    %55 = arith.mulf %19, %cst_18 : f32
    %cst_19 = arith.constant 0.166666672 : f32
    %56 = arith.mulf %20, %cst_19 : f32
    %cst_20 = arith.constant 0.166666672 : f32
    %57 = arith.mulf %21, %cst_20 : f32
    %cst_21 = arith.constant 0.166666672 : f32
    %58 = arith.mulf %22, %cst_21 : f32
    %cst_22 = arith.constant 0.166666672 : f32
    %59 = arith.mulf %23, %cst_22 : f32
    %cst_23 = arith.constant 0.166666672 : f32
    %60 = arith.mulf %24, %cst_23 : f32
    %cst_24 = arith.constant 0.166666672 : f32
    %61 = arith.mulf %25, %cst_24 : f32
    %cst_25 = arith.constant 0.166666672 : f32
    %62 = arith.mulf %26, %cst_25 : f32
    %cst_26 = arith.constant 0.166666672 : f32
    %63 = arith.mulf %27, %cst_26 : f32
    %cst_27 = arith.constant 0.166666672 : f32
    %64 = arith.mulf %28, %cst_27 : f32
    %cst_28 = arith.constant 0.166666672 : f32
    %65 = arith.mulf %29, %cst_28 : f32
    %cst_29 = arith.constant 0.166666672 : f32
    %66 = arith.mulf %30, %cst_29 : f32
    %cst_30 = arith.constant 0.166666672 : f32
    %67 = arith.mulf %31, %cst_30 : f32
    %cst_31 = arith.constant 0.166666672 : f32
    %68 = arith.mulf %32, %cst_31 : f32
    %cst_32 = arith.constant 0.166666672 : f32
    %69 = arith.mulf %33, %cst_32 : f32
    %cst_33 = arith.constant 0.166666672 : f32
    %70 = arith.mulf %34, %cst_33 : f32
    %cst_34 = arith.constant 0.166666672 : f32
    %71 = arith.mulf %35, %cst_34 : f32
    %c0_35 = arith.constant 0 : index
    %72 = memref.load %arg2[%c0_35] : memref<3xf32, #tpu.memory_space<smem>>
    %c1_36 = arith.constant 1 : index
    %73 = memref.load %arg2[%c1_36] : memref<3xf32, #tpu.memory_space<smem>>
    %c2_37 = arith.constant 2 : index
    %74 = memref.load %arg2[%c2_37] : memref<3xf32, #tpu.memory_space<smem>>
    %cst_38 = arith.constant 0.000000e+00 : f32
    %75 = vector.broadcast %cst_38 : f32 to vector<3x72x128xf32>
    %c0_39 = arith.constant 0 : index
    %c0_40 = arith.constant 0 : index
    %c0_41 = arith.constant 0 : index
    %76 = vector.load %arg5[%c0_39, %c0_40, %c0_41] : memref<3x72x128xf32, #tpu.memory_space<vmem>>, vector<3x72x128xf32>
    tpu.vector_store %arg5[%c0_39, %c0_40, %c0_41], %75 {strides = array<i32>} : memref<3x72x128xf32, #tpu.memory_space<vmem>>, vector<3x72x128xf32>,
    %c0_42 = arith.constant 0 : index
    %c0_43 = arith.constant 0 : index
    %c0_44 = arith.constant 0 : index
    %c0_45 = arith.constant 0 : index
    %77 = vector.load %arg3[%c0_42, %c0_43, %c0_44, %c0_45] : memref<1x3x64x64xf32, #tpu.memory_space<vmem>>, vector<1x1x64x64xf32>
    %78 = vector.shape_cast %77 : vector<1x1x64x64xf32> to vector<64x64xf32>
    %c0_46 = arith.constant 0 : index
    %c0_47 = arith.constant 0 : index
    %c0_48 = arith.constant 0 : index
    %79 = vector.load %arg5[%c0_46, %c0_47, %c0_48] : memref<3x72x128xf32, #tpu.memory_space<vmem>>, vector<1x64x64xf32>
    %80 = vector.shape_cast %79 : vector<1x64x64xf32> to vector<64x64xf32>
    %81 = vector.shape_cast %78 : vector<64x64xf32> to vector<1x64x64xf32>
    tpu.vector_store %arg5[%c0_46, %c0_47, %c0_48], %81 {strides = array<i32>} : memref<3x72x128xf32, #tpu.memory_space<vmem>>, vector<1x64x64xf32>,
    %c0_49 = arith.constant 0 : index
    %c1_50 = arith.constant 1 : index
    %c0_51 = arith.constant 0 : index
    %c0_52 = arith.constant 0 : index
    %82 = vector.load %arg3[%c0_49, %c1_50, %c0_51, %c0_52] : memref<1x3x64x64xf32, #tpu.memory_space<vmem>>, vector<1x1x64x64xf32>
    %83 = vector.shape_cast %82 : vector<1x1x64x64xf32> to vector<64x64xf32>
    %c1_53 = arith.constant 1 : index
    %c0_54 = arith.constant 0 : index
    %c0_55 = arith.constant 0 : index
    %84 = vector.load %arg5[%c1_53, %c0_54, %c0_55] : memref<3x72x128xf32, #tpu.memory_space<vmem>>, vector<1x64x64xf32>
    %85 = vector.shape_cast %84 : vector<1x64x64xf32> to vector<64x64xf32>
    %86 = vector.shape_cast %83 : vector<64x64xf32> to vector<1x64x64xf32>
    tpu.vector_store %arg5[%c1_53, %c0_54, %c0_55], %86 {strides = array<i32>} : memref<3x72x128xf32, #tpu.memory_space<vmem>>, vector<1x64x64xf32>,
    %c0_56 = arith.constant 0 : index
    %c2_57 = arith.constant 2 : index
    %c0_58 = arith.constant 0 : index
    %c0_59 = arith.constant 0 : index
    %87 = vector.load %arg3[%c0_56, %c2_57, %c0_58, %c0_59] : memref<1x3x64x64xf32, #tpu.memory_space<vmem>>, vector<1x1x64x64xf32>
    %88 = vector.shape_cast %87 : vector<1x1x64x64xf32> to vector<64x64xf32>
    %c2_60 = arith.constant 2 : index
    %c0_61 = arith.constant 0 : index
    %c0_62 = arith.constant 0 : index
    %89 = vector.load %arg5[%c2_60, %c0_61, %c0_62] : memref<3x72x128xf32, #tpu.memory_space<vmem>>, vector<1x64x64xf32>
    %90 = vector.shape_cast %89 : vector<1x64x64xf32> to vector<64x64xf32>
    %91 = vector.shape_cast %88 : vector<64x64xf32> to vector<1x64x64xf32>
    tpu.vector_store %arg5[%c2_60, %c0_61, %c0_62], %91 {strides = array<i32>} : memref<3x72x128xf32, #tpu.memory_space<vmem>>, vector<1x64x64xf32>,
    %92 = vector.broadcast %72 : f32 to vector<72x128xf32>
    %93 = vector.broadcast %73 : f32 to vector<72x128xf32>
    %94 = vector.broadcast %74 : f32 to vector<72x128xf32>
    %c0_63 = arith.constant 0 : index
    %c0_64 = arith.constant 0 : index
    %c0_65 = arith.constant 0 : index
    %95 = vector.load %arg5[%c0_63, %c0_64, %c0_65] : memref<3x72x128xf32, #tpu.memory_space<vmem>>, vector<1x72x128xf32>
    %96 = vector.shape_cast %95 : vector<1x72x128xf32> to vector<72x128xf32>
    %97 = vector.broadcast %3 : f32 to vector<72x128xf32>
    %98 = arith.mulf %97, %96 : vector<72x128xf32>
    %99 = arith.addf %92, %98 : vector<72x128xf32>
    %100 = vector.broadcast %15 : f32 to vector<72x128xf32>
    %101 = arith.mulf %100, %96 : vector<72x128xf32>
    %102 = arith.addf %93, %101 : vector<72x128xf32>
    %103 = vector.broadcast %27 : f32 to vector<72x128xf32>
    %104 = arith.mulf %103, %96 : vector<72x128xf32>
    %105 = arith.addf %94, %104 : vector<72x128xf32>
    %c1_i32 = arith.constant 1 : i32
    %106 = tpu.dynamic_rotate %96 by %c1_i32 dim 1 : vector<72x128xf32>, i32 -> vector<72x128xf32>
    %107 = vector.broadcast %2 : f32 to vector<72x128xf32>
    %108 = arith.mulf %107, %106 : vector<72x128xf32>
    %109 = arith.addf %99, %108 : vector<72x128xf32>
    %110 = vector.broadcast %14 : f32 to vector<72x128xf32>
    %111 = arith.mulf %110, %106 : vector<72x128xf32>
    %112 = arith.addf %102, %111 : vector<72x128xf32>
    %113 = vector.broadcast %26 : f32 to vector<72x128xf32>
    %114 = arith.mulf %113, %106 : vector<72x128xf32>
    %115 = arith.addf %105, %114 : vector<72x128xf32>
    %c1_i32_66 = arith.constant 1 : i32
    %116 = tpu.dynamic_rotate %96 by %c1_i32_66 dim 0 : vector<72x128xf32>, i32 -> vector<72x128xf32>
    %117 = vector.broadcast %1 : f32 to vector<72x128xf32>
    %118 = arith.mulf %117, %116 : vector<72x128xf32>
    %119 = arith.addf %109, %118 : vector<72x128xf32>
    %120 = vector.broadcast %13 : f32 to vector<72x128xf32>
    %121 = arith.mulf %120, %116 : vector<72x128xf32>
    %122 = arith.addf %112, %121 : vector<72x128xf32>
    %123 = vector.broadcast %25 : f32 to vector<72x128xf32>
    %124 = arith.mulf %123, %116 : vector<72x128xf32>
    %125 = arith.addf %115, %124 : vector<72x128xf32>
    %c1_i32_67 = arith.constant 1 : i32
    %126 = tpu.dynamic_rotate %116 by %c1_i32_67 dim 1 : vector<72x128xf32>, i32 -> vector<72x128xf32>
    %127 = vector.broadcast %0 : f32 to vector<72x128xf32>
    %128 = arith.mulf %127, %126 : vector<72x128xf32>
    %129 = arith.addf %119, %128 : vector<72x128xf32>
    %130 = vector.broadcast %12 : f32 to vector<72x128xf32>
    %131 = arith.mulf %130, %126 : vector<72x128xf32>
    %132 = arith.addf %122, %131 : vector<72x128xf32>
    %133 = vector.broadcast %24 : f32 to vector<72x128xf32>
    %134 = arith.mulf %133, %126 : vector<72x128xf32>
    %135 = arith.addf %125, %134 : vector<72x128xf32>
    %c1_68 = arith.constant 1 : index
    %c0_69 = arith.constant 0 : index
    %c0_70 = arith.constant 0 : index
    %136 = vector.load %arg5[%c1_68, %c0_69, %c0_70] : memref<3x72x128xf32, #tpu.memory_space<vmem>>, vector<1x72x128xf32>
    %137 = vector.shape_cast %136 : vector<1x72x128xf32> to vector<72x128xf32>
    %138 = vector.broadcast %7 : f32 to vector<72x128xf32>
    %139 = arith.mulf %138, %137 : vector<72x128xf32>
    %140 = arith.addf %129, %139 : vector<72x128xf32>
    %141 = vector.broadcast %19 : f32 to vector<72x128xf32>
    %142 = arith.mulf %141, %137 : vector<72x128xf32>
    %143 = arith.addf %132, %142 : vector<72x128xf32>
    %144 = vector.broadcast %31 : f32 to vector<72x128xf32>
    %145 = arith.mulf %144, %137 : vector<72x128xf32>
    %146 = arith.addf %135, %145 : vector<72x128xf32>
    %c1_i32_71 = arith.constant 1 : i32
    %147 = tpu.dynamic_rotate %137 by %c1_i32_71 dim 1 : vector<72x128xf32>, i32 -> vector<72x128xf32>
    %148 = vector.broadcast %6 : f32 to vector<72x128xf32>
    %149 = arith.mulf %148, %147 : vector<72x128xf32>
    %150 = arith.addf %140, %149 : vector<72x128xf32>
    %151 = vector.broadcast %18 : f32 to vector<72x128xf32>
    %152 = arith.mulf %151, %147 : vector<72x128xf32>
    %153 = arith.addf %143, %152 : vector<72x128xf32>
    %154 = vector.broadcast %30 : f32 to vector<72x128xf32>
    %155 = arith.mulf %154, %147 : vector<72x128xf32>
    %156 = arith.addf %146, %155 : vector<72x128xf32>
    %c1_i32_72 = arith.constant 1 : i32
    %157 = tpu.dynamic_rotate %137 by %c1_i32_72 dim 0 : vector<72x128xf32>, i32 -> vector<72x128xf32>
    %158 = vector.broadcast %5 : f32 to vector<72x128xf32>
    %159 = arith.mulf %158, %157 : vector<72x128xf32>
    %160 = arith.addf %150, %159 : vector<72x128xf32>
    %161 = vector.broadcast %17 : f32 to vector<72x128xf32>
    %162 = arith.mulf %161, %157 : vector<72x128xf32>
    %163 = arith.addf %153, %162 : vector<72x128xf32>
    %164 = vector.broadcast %29 : f32 to vector<72x128xf32>
    %165 = arith.mulf %164, %157 : vector<72x128xf32>
    %166 = arith.addf %156, %165 : vector<72x128xf32>
    %c1_i32_73 = arith.constant 1 : i32
    %167 = tpu.dynamic_rotate %157 by %c1_i32_73 dim 1 : vector<72x128xf32>, i32 -> vector<72x128xf32>
    %168 = vector.broadcast %4 : f32 to vector<72x128xf32>
    %169 = arith.mulf %168, %167 : vector<72x128xf32>
    %170 = arith.addf %160, %169 : vector<72x128xf32>
    %171 = vector.broadcast %16 : f32 to vector<72x128xf32>
    %172 = arith.mulf %171, %167 : vector<72x128xf32>
    %173 = arith.addf %163, %172 : vector<72x128xf32>
    %174 = vector.broadcast %28 : f32 to vector<72x128xf32>
    %175 = arith.mulf %174, %167 : vector<72x128xf32>
    %176 = arith.addf %166, %175 : vector<72x128xf32>
    %c2_74 = arith.constant 2 : index
    %c0_75 = arith.constant 0 : index
    %c0_76 = arith.constant 0 : index
    %177 = vector.load %arg5[%c2_74, %c0_75, %c0_76] : memref<3x72x128xf32, #tpu.memory_space<vmem>>, vector<1x72x128xf32>
    %178 = vector.shape_cast %177 : vector<1x72x128xf32> to vector<72x128xf32>
    %179 = vector.broadcast %11 : f32 to vector<72x128xf32>
    %180 = arith.mulf %179, %178 : vector<72x128xf32>
    %181 = arith.addf %170, %180 : vector<72x128xf32>
    %182 = vector.broadcast %23 : f32 to vector<72x128xf32>
    %183 = arith.mulf %182, %178 : vector<72x128xf32>
    %184 = arith.addf %173, %183 : vector<72x128xf32>
    %185 = vector.broadcast %35 : f32 to vector<72x128xf32>
    %186 = arith.mulf %185, %178 : vector<72x128xf32>
    %187 = arith.addf %176, %186 : vector<72x128xf32>
    %c1_i32_77 = arith.constant 1 : i32
    %188 = tpu.dynamic_rotate %178 by %c1_i32_77 dim 1 : vector<72x128xf32>, i32 -> vector<72x128xf32>
    %189 = vector.broadcast %10 : f32 to vector<72x128xf32>
    %190 = arith.mulf %189, %188 : vector<72x128xf32>
    %191 = arith.addf %181, %190 : vector<72x128xf32>
    %192 = vector.broadcast %22 : f32 to vector<72x128xf32>
    %193 = arith.mulf %192, %188 : vector<72x128xf32>
    %194 = arith.addf %184, %193 : vector<72x128xf32>
    %195 = vector.broadcast %34 : f32 to vector<72x128xf32>
    %196 = arith.mulf %195, %188 : vector<72x128xf32>
    %197 = arith.addf %187, %196 : vector<72x128xf32>
    %c1_i32_78 = arith.constant 1 : i32
    %198 = tpu.dynamic_rotate %178 by %c1_i32_78 dim 0 : vector<72x128xf32>, i32 -> vector<72x128xf32>
    %199 = vector.broadcast %9 : f32 to vector<72x128xf32>
    %200 = arith.mulf %199, %198 : vector<72x128xf32>
    %201 = arith.addf %191, %200 : vector<72x128xf32>
    %202 = vector.broadcast %21 : f32 to vector<72x128xf32>
    %203 = arith.mulf %202, %198 : vector<72x128xf32>
    %204 = arith.addf %194, %203 : vector<72x128xf32>
    %205 = vector.broadcast %33 : f32 to vector<72x128xf32>
    %206 = arith.mulf %205, %198 : vector<72x128xf32>
    %207 = arith.addf %197, %206 : vector<72x128xf32>
    %c1_i32_79 = arith.constant 1 : i32
    %208 = tpu.dynamic_rotate %198 by %c1_i32_79 dim 1 : vector<72x128xf32>, i32 -> vector<72x128xf32>
    %209 = vector.broadcast %8 : f32 to vector<72x128xf32>
    %210 = arith.mulf %209, %208 : vector<72x128xf32>
    %211 = arith.addf %201, %210 : vector<72x128xf32>
    %212 = vector.broadcast %20 : f32 to vector<72x128xf32>
    %213 = arith.mulf %212, %208 : vector<72x128xf32>
    %214 = arith.addf %204, %213 : vector<72x128xf32>
    %215 = vector.broadcast %32 : f32 to vector<72x128xf32>
    %216 = arith.mulf %215, %208 : vector<72x128xf32>
    %217 = arith.addf %207, %216 : vector<72x128xf32>
    %218 = tpu.iota {dimensions = array<i32: 0>} : vector<72x128xi32>
    %219 = tpu.iota {dimensions = array<i32: 1>} : vector<72x128xi32>
    %c65_i32 = arith.constant 65 : i32
    %220 = vector.broadcast %c65_i32 : i32 to vector<72x128xi32>
    %221 = arith.cmpi slt, %218, %220 : vector<72x128xi32>
    %c65_i32_80 = arith.constant 65 : i32
    %222 = vector.broadcast %c65_i32_80 : i32 to vector<72x128xi32>
    %223 = arith.cmpi slt, %219, %222 : vector<72x128xi32>
    %224 = arith.andi %221, %223 : vector<72x128xi1>
    %cst_81 = arith.constant 1.000000e+00 : f32
    %cst_82 = arith.constant 0.000000e+00 : f32
    %225 = vector.broadcast %cst_81 : f32 to vector<72x128xf32>
    %226 = vector.broadcast %cst_82 : f32 to vector<72x128xf32>
    %227 = arith.select %224, %225, %226 : vector<72x128xi1>, vector<72x128xf32>
    %cst_83 = arith.constant 3.000000e+00 : f32
    %228 = vector.broadcast %cst_83 : f32 to vector<72x128xf32>
    %229 = arith.addf %211, %228 : vector<72x128xf32>
    %cst_84 = arith.constant 0.000000e+00 : f32
    %cst_85 = arith.constant 6.000000e+00 : f32
    %230 = vector.broadcast %cst_84 : f32 to vector<72x128xf32>
    %231 = arith.maximumf %230, %229 : vector<72x128xf32>
    %232 = vector.broadcast %cst_85 : f32 to vector<72x128xf32>
    %233 = arith.minimumf %232, %231 : vector<72x128xf32>
    %234 = arith.mulf %211, %233 : vector<72x128xf32>
    %235 = arith.mulf %234, %227 : vector<72x128xf32>
    %c0_86 = arith.constant 0 : index
    %c0_87 = arith.constant 0 : index
    %c0_88 = arith.constant 0 : index
    %236 = vector.load %arg6[%c0_86, %c0_87, %c0_88] : memref<3x72x128xf32, #tpu.memory_space<vmem>>, vector<1x72x128xf32>
    %237 = vector.shape_cast %236 : vector<1x72x128xf32> to vector<72x128xf32>
    %238 = vector.shape_cast %235 : vector<72x128xf32> to vector<1x72x128xf32>
    tpu.vector_store %arg6[%c0_86, %c0_87, %c0_88], %238 {strides = array<i32>} : memref<3x72x128xf32, #tpu.memory_space<vmem>>, vector<1x72x128xf32>,
    %cst_89 = arith.constant 3.000000e+00 : f32
    %239 = vector.broadcast %cst_89 : f32 to vector<72x128xf32>
    %240 = arith.addf %214, %239 : vector<72x128xf32>
    %cst_90 = arith.constant 0.000000e+00 : f32
    %cst_91 = arith.constant 6.000000e+00 : f32
    %241 = vector.broadcast %cst_90 : f32 to vector<72x128xf32>
    %242 = arith.maximumf %241, %240 : vector<72x128xf32>
    %243 = vector.broadcast %cst_91 : f32 to vector<72x128xf32>
    %244 = arith.minimumf %243, %242 : vector<72x128xf32>
    %245 = arith.mulf %214, %244 : vector<72x128xf32>
    %246 = arith.mulf %245, %227 : vector<72x128xf32>
    %c1_92 = arith.constant 1 : index
    %c0_93 = arith.constant 0 : index
    %c0_94 = arith.constant 0 : index
    %247 = vector.load %arg6[%c1_92, %c0_93, %c0_94] : memref<3x72x128xf32, #tpu.memory_space<vmem>>, vector<1x72x128xf32>
    %248 = vector.shape_cast %247 : vector<1x72x128xf32> to vector<72x128xf32>
    %249 = vector.shape_cast %246 : vector<72x128xf32> to vector<1x72x128xf32>
    tpu.vector_store %arg6[%c1_92, %c0_93, %c0_94], %249 {strides = array<i32>} : memref<3x72x128xf32, #tpu.memory_space<vmem>>, vector<1x72x128xf32>,
    %cst_95 = arith.constant 3.000000e+00 : f32
    %250 = vector.broadcast %cst_95 : f32 to vector<72x128xf32>
    %251 = arith.addf %217, %250 : vector<72x128xf32>
    %cst_96 = arith.constant 0.000000e+00 : f32
    %cst_97 = arith.constant 6.000000e+00 : f32
    %252 = vector.broadcast %cst_96 : f32 to vector<72x128xf32>
    %253 = arith.maximumf %252, %251 : vector<72x128xf32>
    %254 = vector.broadcast %cst_97 : f32 to vector<72x128xf32>
    %255 = arith.minimumf %254, %253 : vector<72x128xf32>
    %256 = arith.mulf %217, %255 : vector<72x128xf32>
    %257 = arith.mulf %256, %227 : vector<72x128xf32>
    %c2_98 = arith.constant 2 : index
    %c0_99 = arith.constant 0 : index
    %c0_100 = arith.constant 0 : index
    %258 = vector.load %arg6[%c2_98, %c0_99, %c0_100] : memref<3x72x128xf32, #tpu.memory_space<vmem>>, vector<1x72x128xf32>
    %259 = vector.shape_cast %258 : vector<1x72x128xf32> to vector<72x128xf32>
    %260 = vector.shape_cast %257 : vector<72x128xf32> to vector<1x72x128xf32>
    tpu.vector_store %arg6[%c2_98, %c0_99, %c0_100], %260 {strides = array<i32>} : memref<3x72x128xf32, #tpu.memory_space<vmem>>, vector<1x72x128xf32>,
    %261 = vector.broadcast %72 : f32 to vector<72x128xf32>
    %262 = vector.broadcast %73 : f32 to vector<72x128xf32>
    %263 = vector.broadcast %74 : f32 to vector<72x128xf32>
    %c0_101 = arith.constant 0 : index
    %c0_102 = arith.constant 0 : index
    %c0_103 = arith.constant 0 : index
    %264 = vector.load %arg6[%c0_101, %c0_102, %c0_103] : memref<3x72x128xf32, #tpu.memory_space<vmem>>, vector<1x72x128xf32>
    %265 = vector.shape_cast %264 : vector<1x72x128xf32> to vector<72x128xf32>
    %266 = vector.broadcast %39 : f32 to vector<72x128xf32>
    %267 = arith.mulf %266, %265 : vector<72x128xf32>
    %268 = arith.addf %261, %267 : vector<72x128xf32>
    %269 = vector.broadcast %51 : f32 to vector<72x128xf32>
    %270 = arith.mulf %269, %265 : vector<72x128xf32>
    %271 = arith.addf %262, %270 : vector<72x128xf32>
    %272 = vector.broadcast %63 : f32 to vector<72x128xf32>
    %273 = arith.mulf %272, %265 : vector<72x128xf32>
    %274 = arith.addf %263, %273 : vector<72x128xf32>
    %c1_i32_104 = arith.constant 1 : i32
    %275 = tpu.dynamic_rotate %265 by %c1_i32_104 dim 1 : vector<72x128xf32>, i32 -> vector<72x128xf32>
    %276 = vector.broadcast %38 : f32 to vector<72x128xf32>
    %277 = arith.mulf %276, %275 : vector<72x128xf32>
    %278 = arith.addf %268, %277 : vector<72x128xf32>
    %279 = vector.broadcast %50 : f32 to vector<72x128xf32>
    %280 = arith.mulf %279, %275 : vector<72x128xf32>
    %281 = arith.addf %271, %280 : vector<72x128xf32>
    %282 = vector.broadcast %62 : f32 to vector<72x128xf32>
    %283 = arith.mulf %282, %275 : vector<72x128xf32>
    %284 = arith.addf %274, %283 : vector<72x128xf32>
    %c1_i32_105 = arith.constant 1 : i32
    %285 = tpu.dynamic_rotate %265 by %c1_i32_105 dim 0 : vector<72x128xf32>, i32 -> vector<72x128xf32>
    %286 = vector.broadcast %37 : f32 to vector<72x128xf32>
    %287 = arith.mulf %286, %285 : vector<72x128xf32>
    %288 = arith.addf %278, %287 : vector<72x128xf32>
    %289 = vector.broadcast %49 : f32 to vector<72x128xf32>
    %290 = arith.mulf %289, %285 : vector<72x128xf32>
    %291 = arith.addf %281, %290 : vector<72x128xf32>
    %292 = vector.broadcast %61 : f32 to vector<72x128xf32>
    %293 = arith.mulf %292, %285 : vector<72x128xf32>
    %294 = arith.addf %284, %293 : vector<72x128xf32>
    %c1_i32_106 = arith.constant 1 : i32
    %295 = tpu.dynamic_rotate %285 by %c1_i32_106 dim 1 : vector<72x128xf32>, i32 -> vector<72x128xf32>
    %296 = vector.broadcast %36 : f32 to vector<72x128xf32>
    %297 = arith.mulf %296, %295 : vector<72x128xf32>
    %298 = arith.addf %288, %297 : vector<72x128xf32>
    %299 = vector.broadcast %48 : f32 to vector<72x128xf32>
    %300 = arith.mulf %299, %295 : vector<72x128xf32>
    %301 = arith.addf %291, %300 : vector<72x128xf32>
    %302 = vector.broadcast %60 : f32 to vector<72x128xf32>
    %303 = arith.mulf %302, %295 : vector<72x128xf32>
    %304 = arith.addf %294, %303 : vector<72x128xf32>
    %c1_107 = arith.constant 1 : index
    %c0_108 = arith.constant 0 : index
    %c0_109 = arith.constant 0 : index
    %305 = vector.load %arg6[%c1_107, %c0_108, %c0_109] : memref<3x72x128xf32, #tpu.memory_space<vmem>>, vector<1x72x128xf32>
    %306 = vector.shape_cast %305 : vector<1x72x128xf32> to vector<72x128xf32>
    %307 = vector.broadcast %43 : f32 to vector<72x128xf32>
    %308 = arith.mulf %307, %306 : vector<72x128xf32>
    %309 = arith.addf %298, %308 : vector<72x128xf32>
    %310 = vector.broadcast %55 : f32 to vector<72x128xf32>
    %311 = arith.mulf %310, %306 : vector<72x128xf32>
    %312 = arith.addf %301, %311 : vector<72x128xf32>
    %313 = vector.broadcast %67 : f32 to vector<72x128xf32>
    %314 = arith.mulf %313, %306 : vector<72x128xf32>
    %315 = arith.addf %304, %314 : vector<72x128xf32>
    %c1_i32_110 = arith.constant 1 : i32
    %316 = tpu.dynamic_rotate %306 by %c1_i32_110 dim 1 : vector<72x128xf32>, i32 -> vector<72x128xf32>
    %317 = vector.broadcast %42 : f32 to vector<72x128xf32>
    %318 = arith.mulf %317, %316 : vector<72x128xf32>
    %319 = arith.addf %309, %318 : vector<72x128xf32>
    %320 = vector.broadcast %54 : f32 to vector<72x128xf32>
    %321 = arith.mulf %320, %316 : vector<72x128xf32>
    %322 = arith.addf %312, %321 : vector<72x128xf32>
    %323 = vector.broadcast %66 : f32 to vector<72x128xf32>
    %324 = arith.mulf %323, %316 : vector<72x128xf32>
    %325 = arith.addf %315, %324 : vector<72x128xf32>
    %c1_i32_111 = arith.constant 1 : i32
    %326 = tpu.dynamic_rotate %306 by %c1_i32_111 dim 0 : vector<72x128xf32>, i32 -> vector<72x128xf32>
    %327 = vector.broadcast %41 : f32 to vector<72x128xf32>
    %328 = arith.mulf %327, %326 : vector<72x128xf32>
    %329 = arith.addf %319, %328 : vector<72x128xf32>
    %330 = vector.broadcast %53 : f32 to vector<72x128xf32>
    %331 = arith.mulf %330, %326 : vector<72x128xf32>
    %332 = arith.addf %322, %331 : vector<72x128xf32>
    %333 = vector.broadcast %65 : f32 to vector<72x128xf32>
    %334 = arith.mulf %333, %326 : vector<72x128xf32>
    %335 = arith.addf %325, %334 : vector<72x128xf32>
    %c1_i32_112 = arith.constant 1 : i32
    %336 = tpu.dynamic_rotate %326 by %c1_i32_112 dim 1 : vector<72x128xf32>, i32 -> vector<72x128xf32>
    %337 = vector.broadcast %40 : f32 to vector<72x128xf32>
    %338 = arith.mulf %337, %336 : vector<72x128xf32>
    %339 = arith.addf %329, %338 : vector<72x128xf32>
    %340 = vector.broadcast %52 : f32 to vector<72x128xf32>
    %341 = arith.mulf %340, %336 : vector<72x128xf32>
    %342 = arith.addf %332, %341 : vector<72x128xf32>
    %343 = vector.broadcast %64 : f32 to vector<72x128xf32>
    %344 = arith.mulf %343, %336 : vector<72x128xf32>
    %345 = arith.addf %335, %344 : vector<72x128xf32>
    %c2_113 = arith.constant 2 : index
    %c0_114 = arith.constant 0 : index
    %c0_115 = arith.constant 0 : index
    %346 = vector.load %arg6[%c2_113, %c0_114, %c0_115] : memref<3x72x128xf32, #tpu.memory_space<vmem>>, vector<1x72x128xf32>
    %347 = vector.shape_cast %346 : vector<1x72x128xf32> to vector<72x128xf32>
    %348 = vector.broadcast %47 : f32 to vector<72x128xf32>
    %349 = arith.mulf %348, %347 : vector<72x128xf32>
    %350 = arith.addf %339, %349 : vector<72x128xf32>
    %351 = vector.broadcast %59 : f32 to vector<72x128xf32>
    %352 = arith.mulf %351, %347 : vector<72x128xf32>
    %353 = arith.addf %342, %352 : vector<72x128xf32>
    %354 = vector.broadcast %71 : f32 to vector<72x128xf32>
    %355 = arith.mulf %354, %347 : vector<72x128xf32>
    %356 = arith.addf %345, %355 : vector<72x128xf32>
    %c1_i32_116 = arith.constant 1 : i32
    %357 = tpu.dynamic_rotate %347 by %c1_i32_116 dim 1 : vector<72x128xf32>, i32 -> vector<72x128xf32>
    %358 = vector.broadcast %46 : f32 to vector<72x128xf32>
    %359 = arith.mulf %358, %357 : vector<72x128xf32>
    %360 = arith.addf %350, %359 : vector<72x128xf32>
    %361 = vector.broadcast %58 : f32 to vector<72x128xf32>
    %362 = arith.mulf %361, %357 : vector<72x128xf32>
    %363 = arith.addf %353, %362 : vector<72x128xf32>
    %364 = vector.broadcast %70 : f32 to vector<72x128xf32>
    %365 = arith.mulf %364, %357 : vector<72x128xf32>
    %366 = arith.addf %356, %365 : vector<72x128xf32>
    %c1_i32_117 = arith.constant 1 : i32
    %367 = tpu.dynamic_rotate %347 by %c1_i32_117 dim 0 : vector<72x128xf32>, i32 -> vector<72x128xf32>
    %368 = vector.broadcast %45 : f32 to vector<72x128xf32>
    %369 = arith.mulf %368, %367 : vector<72x128xf32>
    %370 = arith.addf %360, %369 : vector<72x128xf32>
    %371 = vector.broadcast %57 : f32 to vector<72x128xf32>
    %372 = arith.mulf %371, %367 : vector<72x128xf32>
    %373 = arith.addf %363, %372 : vector<72x128xf32>
    %374 = vector.broadcast %69 : f32 to vector<72x128xf32>
    %375 = arith.mulf %374, %367 : vector<72x128xf32>
    %376 = arith.addf %366, %375 : vector<72x128xf32>
    %c1_i32_118 = arith.constant 1 : i32
    %377 = tpu.dynamic_rotate %367 by %c1_i32_118 dim 1 : vector<72x128xf32>, i32 -> vector<72x128xf32>
    %378 = vector.broadcast %44 : f32 to vector<72x128xf32>
    %379 = arith.mulf %378, %377 : vector<72x128xf32>
    %380 = arith.addf %370, %379 : vector<72x128xf32>
    %381 = vector.broadcast %56 : f32 to vector<72x128xf32>
    %382 = arith.mulf %381, %377 : vector<72x128xf32>
    %383 = arith.addf %373, %382 : vector<72x128xf32>
    %384 = vector.broadcast %68 : f32 to vector<72x128xf32>
    %385 = arith.mulf %384, %377 : vector<72x128xf32>
    %386 = arith.addf %376, %385 : vector<72x128xf32>
    %387 = vector.extract_strided_slice %380 {offsets = [0, 0], sizes = [66, 66], strides = [1, 1]} : vector<72x128xf32> to vector<66x66xf32>
    %c0_119 = arith.constant 0 : index
    %c0_120 = arith.constant 0 : index
    %c0_121 = arith.constant 0 : index
    %c0_122 = arith.constant 0 : index
    %388 = vector.load %arg4[%c0_119, %c0_120, %c0_121, %c0_122] : memref<1x3x66x66xf32, #tpu.memory_space<vmem>>, vector<1x1x66x66xf32>
    %389 = vector.shape_cast %388 : vector<1x1x66x66xf32> to vector<66x66xf32>
    %390 = vector.shape_cast %387 : vector<66x66xf32> to vector<1x1x66x66xf32>
    tpu.vector_store %arg4[%c0_119, %c0_120, %c0_121, %c0_122], %390 {strides = array<i32>} : memref<1x3x66x66xf32, #tpu.memory_space<vmem>>, vector<1x1x66x66xf32>,
    %391 = vector.extract_strided_slice %383 {offsets = [0, 0], sizes = [66, 66], strides = [1, 1]} : vector<72x128xf32> to vector<66x66xf32>
    %c0_123 = arith.constant 0 : index
    %c1_124 = arith.constant 1 : index
    %c0_125 = arith.constant 0 : index
    %c0_126 = arith.constant 0 : index
    %392 = vector.load %arg4[%c0_123, %c1_124, %c0_125, %c0_126] : memref<1x3x66x66xf32, #tpu.memory_space<vmem>>, vector<1x1x66x66xf32>
    %393 = vector.shape_cast %392 : vector<1x1x66x66xf32> to vector<66x66xf32>
    %394 = vector.shape_cast %391 : vector<66x66xf32> to vector<1x1x66x66xf32>
    tpu.vector_store %arg4[%c0_123, %c1_124, %c0_125, %c0_126], %394 {strides = array<i32>} : memref<1x3x66x66xf32, #tpu.memory_space<vmem>>, vector<1x1x66x66xf32>,
    %395 = vector.extract_strided_slice %386 {offsets = [0, 0], sizes = [66, 66], strides = [1, 1]} : vector<72x128xf32> to vector<66x66xf32>
    %c0_127 = arith.constant 0 : index
    %c2_128 = arith.constant 2 : index
    %c0_129 = arith.constant 0 : index
    %c0_130 = arith.constant 0 : index
    %396 = vector.load %arg4[%c0_127, %c2_128, %c0_129, %c0_130] : memref<1x3x66x66xf32, #tpu.memory_space<vmem>>, vector<1x1x66x66xf32>
    %397 = vector.shape_cast %396 : vector<1x1x66x66xf32> to vector<66x66xf32>
    %398 = vector.shape_cast %395 : vector<66x66xf32> to vector<1x1x66x66xf32>
    tpu.vector_store %arg4[%c0_127, %c2_128, %c0_129, %c0_130], %398 {strides = array<i32>} : memref<1x3x66x66xf32, #tpu.memory_space<vmem>>, vector<1x1x66x66xf32>,
    return
  }
  func.func @transform_0(%arg0: i32, %arg1: memref<36xf32, #tpu.memory_space<smem>>, %arg2: memref<3xf32, #tpu.memory_space<smem>>) -> (i32, i32, i32, i32) {
    %c0_i32 = arith.constant 0 : i32
    %c0_i32_0 = arith.constant 0 : i32
    %c0_i32_1 = arith.constant 0 : i32
    %c0_i32_2 = arith.constant 0 : i32
    return %arg0, %c0_i32, %c0_i32_0, %c0_i32_1 : i32, i32, i32, i32
  }
  func.func @transform_1(%arg0: i32, %arg1: memref<36xf32, #tpu.memory_space<smem>>, %arg2: memref<3xf32, #tpu.memory_space<smem>>) -> (i32, i32, i32, i32) {
    %c0_i32 = arith.constant 0 : i32
    %c0_i32_0 = arith.constant 0 : i32
    %c0_i32_1 = arith.constant 0 : i32
    %c0_i32_2 = arith.constant 0 : i32
    return %arg0, %c0_i32, %c0_i32_0, %c0_i32_1 : i32, i32, i32, i32
  }
}

</mosaic_0001>

<llo_original>
// kernel: tpu_custom_call.1
$region0: #{tpu_custom_call.1}
  #allocation0 [shape = 'u32[]', space=smem, size = 0x4, offset = 0x4, fixed_abs, tag = 'smem constant byte address 0x4 - core index']
  #allocation1 [shape = 'u32[144,128]{1,0:T(1,128)}', space=vmem, size = 0x12000, scoped, tag = 'internal scratch']
  #allocation2 [shape = 'f32[3,72,128]{2,1,0:T(8,128)}', space=vmem, size = 0x1b000, scoped, tag = 'scratch operand']
  #allocation3 [shape = 'f32[3,72,128]{2,1,0:T(8,128)}', space=vmem, size = 0x1b000, scoped, tag = 'scratch operand']
  #allocation4 [shape = 's32[1]{0}', space=sflag, size = 0x4, scoped, tag = 'scoped memory for tpu_custom_call.1']
  #allocation5 [shape = 'u8[512]{0}', space=smem, size = 0x200, scoped, tag = 'prefetched SMEM operand 0']
  #allocation6 [shape = 'u8[512]{0}', space=smem, size = 0x200, scoped, tag = 'prefetched SMEM operand 1']
  %s0 = inlined_call_operand.hbm [shape: f32[36], index: 0, kind: input, shape index: {}]
  %s1 = inlined_call_operand.vmem [shape: f32[3], index: 1, kind: input, shape index: {}]
  %s2 = inlined_call_operand.hbm [shape: f32[2,3,64,64], index: 2, kind: input, shape index: {}]
  %s3 = inlined_call_operand.vmem [shape: f32[2,3,66,66], index: 3, kind: output, shape index: {}]
  %s4 = sld [smem:[#allocation0]]
  $region41: #{tpu_custom_call.1} parent=0
    _
  %s6 = ssub.s32 1, %s4
  %s7 = scalar_select 0, %s6, %s4
  %9 = dma.hbm_to_smem %s0, 16, [#allocation5], [#allocation4]
  %s10 = sshll.u32 %s1, 4
  %s11 = int_to_ptr.vmem [resolvable:$true] %s10
  %13 = dma.vmem_to_smem %s11, 16, [#allocation6], [#allocation4]
  %14 = dma.done [#allocation4], 32
  %15 = sfence
  $region1: #{tpu_custom_call.1} parent=0
    #allocation7 [shape = 'u8[196608]{0}', space=vmem, size = 0x30000, scoped, tag = 'input window, operand 2']
    #allocation8 [shape = 's32[2]{0}', space=sflag, size = 0x8, scoped, tag = 'scoped memory for tpu_custom_call.1']
    %16 = vsyncpa [#allocation8], 0
    %s17 = scalar_lea.sflag [#allocation8], 1
    %18 = vsyncpa %s17, 0
    loop: start=0, step=1, limit=4
    $region2: #{tpu_custom_call.1} parent=1 // loop_pre_header
      _
    $region3: #{tpu_custom_call.1} parent=1 // loop_header
      %s20 = sphi 0, %s24
      %p21 = scmp.ge.s32.totalorder %s20, 4
      %s30 = sphi 0, %s32
      %s33 = sphi 0, %s30
      %s34 = sphi 0, %s33
      %s50 = sphi 0, %s34
      %s56 = sphi 0, %s58
      %s59 = sphi 0, %s56
      %s60 = sphi 0, %s59
      %s76 = sphi 0, %s60
    $region4: #{tpu_custom_call.1} parent=1 // loop_header_branch
      %23 = sbr.rel (%p21) target = $region8
    $region5: #{tpu_custom_call.1} parent=1 // loop_body
      %s25 = ssub.s32 %s20, 1
      %s26 = ssub.s32 %s20, 2
      %s27 = sadd.s32 %s20, 1
      %s28 = ssub.s32 %s20, %s27
      %p29 = scmp.eq.s32.totalorder %s28, 0
      %s31 = sadd.s32 %s30, 1
      %s32 = scalar_select %p29, %s30, %s31
      %p35 = pneg %p29
      %p36 = scmp.eq.s32.totalorder %s20, 1
      %p37 = por %p35, %p36
      %p38 = scmp.ne.s32.totalorder %s30, %s33
      %p39 = scmp.eq.s32.totalorder %s20, 0
      %p40 = por %p38, %p39
      %p41 = scmp.ne.s32.totalorder %s30, %s33
      %p42 = scmp.eq.s32.totalorder %s25, 1
      %p43 = por %p41, %p42
      %p44 = scmp.ne.s32.totalorder %s33, %s34
      %p45 = scmp.eq.s32.totalorder %s25, 0
      %p46 = por %p44, %p45
      %p47 = scmp.ne.s32.totalorder %s33, %s34
      %p48 = scmp.eq.s32.totalorder %s26, 1
      %p49 = por %p47, %p48
      %p51 = scmp.ne.s32.totalorder %s34, %s50
      %p52 = scmp.eq.s32.totalorder %s26, 0
      %p53 = por %p51, %p52
      %s54 = ssub.s32 %s20, %s27
      %p55 = scmp.eq.s32.totalorder %s54, 0
      %s57 = sadd.s32 %s56, 1
      %s58 = scalar_select %p55, %s56, %s57
      %p61 = pneg %p55
      %p62 = scmp.eq.s32.totalorder %s20, 1
      %p63 = por %p61, %p62
      %p64 = scmp.ne.s32.totalorder %s56, %s59
      %p65 = scmp.eq.s32.totalorder %s20, 0
      %p66 = por %p64, %p65
      %p67 = scmp.ne.s32.totalorder %s56, %s59
      %p68 = scmp.eq.s32.totalorder %s25, 1
      %p69 = por %p67, %p68
      %p70 = scmp.ne.s32.totalorder %s59, %s60
      %p71 = scmp.eq.s32.totalorder %s25, 0
      %p72 = por %p70, %p71
      %p73 = scmp.ne.s32.totalorder %s59, %s60
      %p74 = scmp.eq.s32.totalorder %s26, 1
      %p75 = por %p73, %p74
      %p77 = scmp.ne.s32.totalorder %s60, %s76
      %p78 = scmp.eq.s32.totalorder %s26, 0
      %p79 = por %p77, %p78
      %p80 = scmp.le.s32.totalorder 1, %s20
      %p81 = scmp.lt.s32.totalorder %s20, 3
      %p82 = pnand %p80, %p81
      %p83 = pneg %p82
      // Predicated region
      $region9: #{tpu_custom_call.1} parent=5 // pred_check
        _
      $region10: #{tpu_custom_call.1} parent=5 // pred_check_branch
        %85 = sbr.rel (%p82) target = $region12
      $region11: #{tpu_custom_call.1} parent=5 // pred_region
        %s86 = ssub.s32 %s20, 1
      $region12: #{tpu_custom_call.1} parent=5 // pred_fallthru
        _
      %p87 = scmp.lt.s32.totalorder %s20, 2
      // Predicated region
      $region13: #{tpu_custom_call.1} parent=5 // pred_check
        %p88 = pneg %p87
      $region14: #{tpu_custom_call.1} parent=5 // pred_check_branch
        %90 = sbr.rel (%p88) target = $region16
      $region15: #{tpu_custom_call.1} parent=5 // pred_region
        // Predicated region
        $region17: #{tpu_custom_call.1} parent=15 // pred_check
          %p91 = pneg %p40
        $region18: #{tpu_custom_call.1} parent=15 // pred_check_branch
          %93 = sbr.rel (%p91) target = $region20
        $region19: #{tpu_custom_call.1} parent=15 // pred_region
          %s94 = sand.u32 %s30, 1
          %s95 = scalar_lea.sflag [#allocation8], %s94
          %s96 = sand.u32 %s30, 1
          %s97 = smul.addr %s96, 192
          %s98 = scalar_lea.vmem [#allocation7], %s97
          %s100 = ssub.s32 3072, 3072
          %101 = vsyncadd %s95, %s100
          %s102 = smul.addr %s20, 24
          %s103 = smul.addr %s102, 128
          %s104 = scalar_lea.hbm %s2, %s103
          %s105 = sshll.u32 %s98, 4
          %s106 = int_to_ptr.vmem [resolvable:$true] %s105
          %111 = dma.hbm_to_vmem [thread:$0]  %s104, 3072, %s106, %s95, 128, 128, 8
        $region20: #{tpu_custom_call.1} parent=15 // pred_fallthru
          _
      $region16: #{tpu_custom_call.1} parent=5 // pred_fallthru
        _
      %p112 = scmp.le.s32.totalorder 1, %s20
      %p113 = scmp.lt.s32.totalorder %s20, 3
      %p114 = pnand %p112, %p113
      %p115 = pneg %p114
      // Predicated region
      $region21: #{tpu_custom_call.1} parent=5 // pred_check
        _
      $region22: #{tpu_custom_call.1} parent=5 // pred_check_branch
        %117 = sbr.rel (%p114) target = $region24
      $region23: #{tpu_custom_call.1} parent=5 // pred_region
        %s118 = ssub.s32 %s20, 1
        %s119 = sand.u32 %s33, 1
        %s120 = scalar_lea.sflag [#allocation8], %s119
        %s121 = sand.u32 %s33, 1
        %s122 = smul.addr %s121, 192
        %s123 = scalar_lea.vmem [#allocation7], %s122
        // Predicated region
        $region25: #{tpu_custom_call.1} parent=23 // pred_check
          %p124 = pneg %p46
        $region26: #{tpu_custom_call.1} parent=23 // pred_check_branch
          %126 = sbr.rel (%p124) target = $region28
        $region27: #{tpu_custom_call.1} parent=23 // pred_region
          %127 = dma.done %s120, 3072
        $region28: #{tpu_custom_call.1} parent=23 // pred_fallthru
          _
        %s128 = sand.u32 %s33, 1
        %s129 = scalar_lea.sflag [#allocation8], %s128
        %s130 = sand.u32 %s33, 1
        %s131 = smul.addr %s130, 192
        %s132 = scalar_lea.vmem [#allocation7], %s131
        %p133 = pneg %p46
        %p134 = pneg %p43
        %p135 = pneg %p72
        %p136 = pneg %p69
        %p137 = scmp.lt.s32.totalorder %s25, 1
        %s138 = scalar_select %p137, %s25, 1
        %s139 = smul.addr %s138, 27
        %s140 = smul.addr %s139, 8
        %s141 = scalar_lea.vmem %s3, %s140
        %p142 = scmp.lt.s32.totalorder %s25, 1
        %s143 = scalar_select %p142, %s25, 1
        %s144 = smul.addr %s143, 27
        %s145 = smul.addr %s144, 8
        %s146 = scalar_lea.vmem %s3, %s145
        %s147 = sld [smem:[#allocation5]]
        %s148 = sld [smem:[#allocation5 + $0x1]]
        %s149 = sld [smem:[#allocation5 + $0x2]]
        %s150 = sld [smem:[#allocation5 + $0x3]]
        %s151 = sld [smem:[#allocation5 + $0x4]]
        %s152 = sld [smem:[#allocation5 + $0x5]]
        %s153 = sld [smem:[#allocation5 + $0x6]]
        %s154 = sld [smem:[#allocation5 + $0x7]]
        %s155 = sld [smem:[#allocation5 + $0x8]]
        %s156 = sld [smem:[#allocation5 + $0x9]]
        %s157 = sld [smem:[#allocation5 + $0xa]]
        %s158 = sld [smem:[#allocation5 + $0xb]]
        %s159 = sld [smem:[#allocation5 + $0xc]]
        %s160 = sld [smem:[#allocation5 + $0xd]]
        %s161 = sld [smem:[#allocation5 + $0xe]]
        %s162 = sld [smem:[#allocation5 + $0xf]]
        %s163 = sld [smem:[#allocation5 + $0x10]]
        %s164 = sld [smem:[#allocation5 + $0x11]]
        %s165 = sld [smem:[#allocation5 + $0x12]]
        %s166 = sld [smem:[#allocation5 + $0x13]]
        %s167 = sld [smem:[#allocation5 + $0x14]]
        %s168 = sld [smem:[#allocation5 + $0x15]]
        %s169 = sld [smem:[#allocation5 + $0x16]]
        %s170 = sld [smem:[#allocation5 + $0x17]]
        %s171 = sld [smem:[#allocation5 + $0x18]]
        %s172 = sld [smem:[#allocation5 + $0x19]]
        %s173 = sld [smem:[#allocation5 + $0x1a]]
        %s174 = sld [smem:[#allocation5 + $0x1b]]
        %s175 = sld [smem:[#allocation5 + $0x1c]]
        %s176 = sld [smem:[#allocation5 + $0x1d]]
        %s177 = sld [smem:[#allocation5 + $0x1e]]
        %s178 = sld [smem:[#allocation5 + $0x1f]]
        %s179 = sld [smem:[#allocation5 + $0x20]]
        %s180 = sld [smem:[#allocation5 + $0x21]]
        %s181 = sld [smem:[#allocation5 + $0x22]]
        %s182 = sld [smem:[#allocation5 + $0x23]]
        %s183 = smul.f32 %s147, 0.16666667
        %s184 = smul.f32 %s148, 0.16666667
        %s185 = smul.f32 %s149, 0.16666667
        %s186 = smul.f32 %s150, 0.16666667
        %s187 = smul.f32 %s151, 0.16666667
        %s188 = smul.f32 %s152, 0.16666667
        %s189 = smul.f32 %s153, 0.16666667
        %s190 = smul.f32 %s154, 0.16666667
        %s191 = smul.f32 %s155, 0.16666667
        %s192 = smul.f32 %s156, 0.16666667
        %s193 = smul.f32 %s157, 0.16666667
        %s194 = smul.f32 %s158, 0.16666667
        %s195 = smul.f32 %s159, 0.16666667
        %s196 = smul.f32 %s160, 0.16666667
        %s197 = smul.f32 %s161, 0.16666667
        %s198 = smul.f32 %s162, 0.16666667
        %s199 = smul.f32 %s163, 0.16666667
        %s200 = smul.f32 %s164, 0.16666667
        %s201 = smul.f32 %s165, 0.16666667
        %s202 = smul.f32 %s166, 0.16666667
        %s203 = smul.f32 %s167, 0.16666667
        %s204 = smul.f32 %s168, 0.16666667
        %s205 = smul.f32 %s169, 0.16666667
        %s206 = smul.f32 %s170, 0.16666667
        %s207 = smul.f32 %s171, 0.16666667
        %s208 = smul.f32 %s172, 0.16666667
        %s209 = smul.f32 %s173, 0.16666667
        %s210 = smul.f32 %s174, 0.16666667
        %s211 = smul.f32 %s175, 0.16666667
        %s212 = smul.f32 %s176, 0.16666667
        %s213 = smul.f32 %s177, 0.16666667
        %s214 = smul.f32 %s178, 0.16666667
        %s215 = smul.f32 %s179, 0.16666667
        %s216 = smul.f32 %s180, 0.16666667
        %s217 = smul.f32 %s181, 0.16666667
        %s218 = smul.f32 %s182, 0.16666667
        %s219 = sld [smem:[#allocation6]]
        %s220 = sld [smem:[#allocation6 + $0x1]]
        %s221 = sld [smem:[#allocation6 + $0x2]]
        %222 = vst [vmem:[#allocation2] sm:$0xff] 0.0
        %223 = vst [vmem:[#allocation2 + $0x8] sm:$0xff] 0.0
        %224 = vst [vmem:[#allocation2 + $0x10] sm:$0xff] 0.0
        %225 = vst [vmem:[#allocation2 + $0x18] sm:$0xff] 0.0
        %226 = vst [vmem:[#allocation2 + $0x20] sm:$0xff] 0.0
        %227 = vst [vmem:[#allocation2 + $0x28] sm:$0xff] 0.0
        %228 = vst [vmem:[#allocation2 + $0x30] sm:$0xff] 0.0
        %229 = vst [vmem:[#allocation2 + $0x38] sm:$0xff] 0.0
        %230 = vst [vmem:[#allocation2 + $0x40] sm:$0xff] 0.0
        %231 = vst [vmem:[#allocation2 + $0x48] sm:$0xff] 0.0
        %232 = vst [vmem:[#allocation2 + $0x50] sm:$0xff] 0.0
        %233 = vst [vmem:[#allocation2 + $0x58] sm:$0xff] 0.0
        %234 = vst [vmem:[#allocation2 + $0x60] sm:$0xff] 0.0
        %235 = vst [vmem:[#allocation2 + $0x68] sm:$0xff] 0.0
        %236 = vst [vmem:[#allocation2 + $0x70] sm:$0xff] 0.0
        %237 = vst [vmem:[#allocation2 + $0x78] sm:$0xff] 0.0
        %238 = vst [vmem:[#allocation2 + $0x80] sm:$0xff] 0.0
        %239 = vst [vmem:[#allocation2 + $0x88] sm:$0xff] 0.0
        %240 = vst [vmem:[#allocation2 + $0x90] sm:$0xff] 0.0
        %241 = vst [vmem:[#allocation2 + $0x98] sm:$0xff] 0.0
        %242 = vst [vmem:[#allocation2 + $0xa0] sm:$0xff] 0.0
        %243 = vst [vmem:[#allocation2 + $0xa8] sm:$0xff] 0.0
        %244 = vst [vmem:[#allocation2 + $0xb0] sm:$0xff] 0.0
        %245 = vst [vmem:[#allocation2 + $0xb8] sm:$0xff] 0.0
        %246 = vst [vmem:[#allocation2 + $0xc0] sm:$0xff] 0.0
        %247 = vst [vmem:[#allocation2 + $0xc8] sm:$0xff] 0.0
        %248 = vst [vmem:[#allocation2 + $0xd0] sm:$0xff] 0.0
        %v249 = vld [vmem:[%s123] sm:$0xff]
        %v250 = vld [vmem:[%s123 + $0x8] sm:$0xff]
        %v251 = vld [vmem:[%s123 + $0x10] sm:$0xff]
        %v252 = vld [vmem:[%s123 + $0x18] sm:$0xff]
        %v253 = vld [vmem:[%s123 + $0x20] sm:$0xff]
        %v254 = vld [vmem:[%s123 + $0x28] sm:$0xff]
        %v255 = vld [vmem:[%s123 + $0x30] sm:$0xff]
        %v256 = vld [vmem:[%s123 + $0x38] sm:$0xff]
        %vm257 = vcmask 523264
        %258 = vst.msk [vmem:[#allocation2] sm:$0xff] %vm257, %v249
        %259 = vst.msk [vmem:[#allocation2 + $0x8] sm:$0xff] %vm257, %v250
        %260 = vst.msk [vmem:[#allocation2 + $0x10] sm:$0xff] %vm257, %v251
        %261 = vst.msk [vmem:[#allocation2 + $0x18] sm:$0xff] %vm257, %v252
        %262 = vst.msk [vmem:[#allocation2 + $0x20] sm:$0xff] %vm257, %v253
        %263 = vst.msk [vmem:[#allocation2 + $0x28] sm:$0xff] %vm257, %v254
        %264 = vst.msk [vmem:[#allocation2 + $0x30] sm:$0xff] %vm257, %v255
        %265 = vst.msk [vmem:[#allocation2 + $0x38] sm:$0xff] %vm257, %v256
        %s266 = scalar_lea.vmem %s123, 64 [#allocation7]
        %v267 = vld [vmem:[%s266] sm:$0xff]
        %v268 = vld [vmem:[%s266 + $0x8] sm:$0xff]
        %v269 = vld [vmem:[%s266 + $0x10] sm:$0xff]
        %v270 = vld [vmem:[%s266 + $0x18] sm:$0xff]
        %v271 = vld [vmem:[%s266 + $0x20] sm:$0xff]
        %v272 = vld [vmem:[%s266 + $0x28] sm:$0xff]
        %v273 = vld [vmem:[%s266 + $0x30] sm:$0xff]
        %v274 = vld [vmem:[%s266 + $0x38] sm:$0xff]
        %s275 = scalar_lea.vmem [#allocation2], 72
        %276 = vst.msk [vmem:[%s275] sm:$0xff] %vm257, %v267
        %277 = vst.msk [vmem:[%s275 + $0x8] sm:$0xff] %vm257, %v268
        %278 = vst.msk [vmem:[%s275 + $0x10] sm:$0xff] %vm257, %v269
        %279 = vst.msk [vmem:[%s275 + $0x18] sm:$0xff] %vm257, %v270
        %280 = vst.msk [vmem:[%s275 + $0x20] sm:$0xff] %vm257, %v271
        %281 = vst.msk [vmem:[%s275 + $0x28] sm:$0xff] %vm257, %v272
        %282 = vst.msk [vmem:[%s275 + $0x30] sm:$0xff] %vm257, %v273
        %283 = vst.msk [vmem:[%s275 + $0x38] sm:$0xff] %vm257, %v274
        %s284 = scalar_lea.vmem %s123, 128 [#allocation7]
        %v285 = vld [vmem:[%s284] sm:$0xff]
        %v286 = vld [vmem:[%s284 + $0x8] sm:$0xff]
        %v287 = vld [vmem:[%s284 + $0x10] sm:$0xff]
        %v288 = vld [vmem:[%s284 + $0x18] sm:$0xff]
        %v289 = vld [vmem:[%s284 + $0x20] sm:$0xff]
        %v290 = vld [vmem:[%s284 + $0x28] sm:$0xff]
        %v291 = vld [vmem:[%s284 + $0x30] sm:$0xff]
        %v292 = vld [vmem:[%s284 + $0x38] sm:$0xff]
        %s293 = scalar_lea.vmem [#allocation2], 144
        %294 = vst.msk [vmem:[%s293] sm:$0xff] %vm257, %v285
        %295 = vst.msk [vmem:[%s293 + $0x8] sm:$0xff] %vm257, %v286
        %296 = vst.msk [vmem:[%s293 + $0x10] sm:$0xff] %vm257, %v287
        %297 = vst.msk [vmem:[%s293 + $0x18] sm:$0xff] %vm257, %v288
        %298 = vst.msk [vmem:[%s293 + $0x20] sm:$0xff] %vm257, %v289
        %299 = vst.msk [vmem:[%s293 + $0x28] sm:$0xff] %vm257, %v290
        %300 = vst.msk [vmem:[%s293 + $0x30] sm:$0xff] %vm257, %v291
        %301 = vst.msk [vmem:[%s293 + $0x38] sm:$0xff] %vm257, %v292
        %v302 = vstv %s219
        %v303 = vstv %s220
        %v304 = vstv %s221
        %v305 = vld [vmem:[#allocation2] sm:$0xff]
        %v306 = vld [vmem:[#allocation2 + $0x8] sm:$0xff]
        %v307 = vld [vmem:[#allocation2 + $0x10] sm:$0xff]
        %v308 = vld [vmem:[#allocation2 + $0x18] sm:$0xff]
        %v309 = vld [vmem:[#allocation2 + $0x20] sm:$0xff]
        %v310 = vld [vmem:[#allocation2 + $0x28] sm:$0xff]
        %v311 = vld [vmem:[#allocation2 + $0x30] sm:$0xff]
        %v312 = vld [vmem:[#allocation2 + $0x38] sm:$0xff]
        %v313 = vld [vmem:[#allocation2 + $0x40] sm:$0xff]
        %v314 = vstv %s150
        %v315 = vmul.f32 %v314, %v305
        %v316 = vmul.f32 %v314, %v306
        %v317 = vmul.f32 %v314, %v307
        %v318 = vmul.f32 %v314, %v308
        %v319 = vmul.f32 %v314, %v309
        %v320 = vmul.f32 %v314, %v310
        %v321 = vmul.f32 %v314, %v311
        %v322 = vmul.f32 %v314, %v312
        %v323 = vmul.f32 %v314, %v313
        %v324 = vadd.f32 %v302, %v315
        %v325 = vadd.f32 %v302, %v316
        %v326 = vadd.f32 %v302, %v317
        %v327 = vadd.f32 %v302, %v318
        %v328 = vadd.f32 %v302, %v319
        %v329 = vadd.f32 %v302, %v320
        %v330 = vadd.f32 %v302, %v321
        %v331 = vadd.f32 %v302, %v322
        %v332 = vadd.f32 %v302, %v323
        %v333 = vstv %s162
        %v334 = vmul.f32 %v333, %v305
        %v335 = vmul.f32 %v333, %v306
        %v336 = vmul.f32 %v333, %v307
        %v337 = vmul.f32 %v333, %v308
        %v338 = vmul.f32 %v333, %v309
        %v339 = vmul.f32 %v333, %v310
        %v340 = vmul.f32 %v333, %v311
        %v341 = vmul.f32 %v333, %v312
        %v342 = vmul.f32 %v333, %v313
        %v343 = vadd.f32 %v303, %v334
        %v344 = vadd.f32 %v303, %v335
        %v345 = vadd.f32 %v303, %v336
        %v346 = vadd.f32 %v303, %v337
        %v347 = vadd.f32 %v303, %v338
        %v348 = vadd.f32 %v303, %v339
        %v349 = vadd.f32 %v303, %v340
        %v350 = vadd.f32 %v303, %v341
        %v351 = vadd.f32 %v303, %v342
        %v352 = vstv %s174
        %v353 = vmul.f32 %v352, %v305
        %v354 = vmul.f32 %v352, %v306
        %v355 = vmul.f32 %v352, %v307
        %v356 = vmul.f32 %v352, %v308
        %v357 = vmul.f32 %v352, %v309
        %v358 = vmul.f32 %v352, %v310
        %v359 = vmul.f32 %v352, %v311
        %v360 = vmul.f32 %v352, %v312
        %v361 = vmul.f32 %v352, %v313
        %v362 = vadd.f32 %v304, %v353
        %v363 = vadd.f32 %v304, %v354
        %v364 = vadd.f32 %v304, %v355
        %v365 = vadd.f32 %v304, %v356
        %v366 = vadd.f32 %v304, %v357
        %v367 = vadd.f32 %v304, %v358
        %v368 = vadd.f32 %v304, %v359
        %v369 = vadd.f32 %v304, %v360
        %v370 = vadd.f32 %v304, %v361
        %371 = vrot.lane.b32.xlu0 %v305, 1
        %v372 = vpop.permute.xlu0 %371
        %373 = vrot.lane.b32.xlu0 %v306, 1
        %v374 = vpop.permute.xlu0 %373
        %375 = vrot.lane.b32.xlu0 %v307, 1
        %v376 = vpop.permute.xlu0 %375
        %377 = vrot.lane.b32.xlu0 %v308, 1
        %v378 = vpop.permute.xlu0 %377
        %379 = vrot.lane.b32.xlu0 %v309, 1
        %v380 = vpop.permute.xlu0 %379
        %381 = vrot.lane.b32.xlu0 %v310, 1
        %v382 = vpop.permute.xlu0 %381
        %383 = vrot.lane.b32.xlu0 %v311, 1
        %v384 = vpop.permute.xlu0 %383
        %385 = vrot.lane.b32.xlu0 %v312, 1
        %v386 = vpop.permute.xlu0 %385
        %387 = vrot.lane.b32.xlu0 %v313, 1
        %v388 = vpop.permute.xlu0 %387
        %v389 = vstv %s149
        %v390 = vmul.f32 %v389, %v372
        %v391 = vmul.f32 %v389, %v374
        %v392 = vmul.f32 %v389, %v376
        %v393 = vmul.f32 %v389, %v378
        %v394 = vmul.f32 %v389, %v380
        %v395 = vmul.f32 %v389, %v382
        %v396 = vmul.f32 %v389, %v384
        %v397 = vmul.f32 %v389, %v386
        %v398 = vmul.f32 %v389, %v388
        %v399 = vadd.f32 %v324, %v390
        %v400 = vadd.f32 %v325, %v391
        %v401 = vadd.f32 %v326, %v392
        %v402 = vadd.f32 %v327, %v393
        %v403 = vadd.f32 %v328, %v394
        %v404 = vadd.f32 %v329, %v395
        %v405 = vadd.f32 %v330, %v396
        %v406 = vadd.f32 %v331, %v397
        %v407 = vadd.f32 %v332, %v398
        %v408 = vstv %s161
        %v409 = vmul.f32 %v408, %v372
        %v410 = vmul.f32 %v408, %v374
        %v411 = vmul.f32 %v408, %v376
        %v412 = vmul.f32 %v408, %v378
        %v413 = vmul.f32 %v408, %v380
        %v414 = vmul.f32 %v408, %v382
        %v415 = vmul.f32 %v408, %v384
        %v416 = vmul.f32 %v408, %v386
        %v417 = vmul.f32 %v408, %v388
        %v418 = vadd.f32 %v343, %v409
        %v419 = vadd.f32 %v344, %v410
        %v420 = vadd.f32 %v345, %v411
        %v421 = vadd.f32 %v346, %v412
        %v422 = vadd.f32 %v347, %v413
        %v423 = vadd.f32 %v348, %v414
        %v424 = vadd.f32 %v349, %v415
        %v425 = vadd.f32 %v350, %v416
        %v426 = vadd.f32 %v351, %v417
        %v427 = vstv %s173
        %v428 = vmul.f32 %v427, %v372
        %v429 = vmul.f32 %v427, %v374
        %v430 = vmul.f32 %v427, %v376
        %v431 = vmul.f32 %v427, %v378
        %v432 = vmul.f32 %v427, %v380
        %v433 = vmul.f32 %v427, %v382
        %v434 = vmul.f32 %v427, %v384
        %v435 = vmul.f32 %v427, %v386
        %v436 = vmul.f32 %v427, %v388
        %v437 = vadd.f32 %v362, %v428
        %v438 = vadd.f32 %v363, %v429
        %v439 = vadd.f32 %v364, %v430
        %v440 = vadd.f32 %v365, %v431
        %v441 = vadd.f32 %v366, %v432
        %v442 = vadd.f32 %v367, %v433
        %v443 = vadd.f32 %v368, %v434
        %v444 = vadd.f32 %v369, %v435
        %v445 = vadd.f32 %v370, %v436
        %v446 = vrot.slane %v305, 7
        %v447 = vrot.slane %v306, 7
        %v448 = vrot.slane %v307, 7
        %v449 = vrot.slane %v308, 7
        %v450 = vrot.slane %v309, 7
        %v451 = vrot.slane %v310, 7
        %v452 = vrot.slane %v311, 7
        %v453 = vrot.slane %v312, 7
        %v454 = vrot.slane %v313, 7
        %v455 = vlaneseq
        %v456 = vshrl.u32 %v455, 7
        %vm457 = vcmp.lt.s32.totalorder %v456, 1
        %v458 = vsel %vm457, %v453, %v454
        %v459 = vsel %vm457, %v452, %v453
        %v460 = vsel %vm457, %v451, %v452
        %v461 = vsel %vm457, %v450, %v451
        %v462 = vsel %vm457, %v449, %v450
        %v463 = vsel %vm457, %v448, %v449
        %v464 = vsel %vm457, %v447, %v448
        %v465 = vsel %vm457, %v446, %v447
        %v466 = vsel %vm457, %v454, %v446
        %v467 = vstv %s148
        %v468 = vmul.f32 %v467, %v466
        %v469 = vmul.f32 %v467, %v465
        %v470 = vmul.f32 %v467, %v464
        %v471 = vmul.f32 %v467, %v463
        %v472 = vmul.f32 %v467, %v462
        %v473 = vmul.f32 %v467, %v461
        %v474 = vmul.f32 %v467, %v460
        %v475 = vmul.f32 %v467, %v459
        %v476 = vmul.f32 %v467, %v458
        %v477 = vadd.f32 %v399, %v468
        %v478 = vadd.f32 %v400, %v469
        %v479 = vadd.f32 %v401, %v470
        %v480 = vadd.f32 %v402, %v471
        %v481 = vadd.f32 %v403, %v472
        %v482 = vadd.f32 %v404, %v473
        %v483 = vadd.f32 %v405, %v474
        %v484 = vadd.f32 %v406, %v475
        %v485 = vadd.f32 %v407, %v476
        %v486 = vstv %s160
        %v487 = vmul.f32 %v486, %v466
        %v488 = vmul.f32 %v486, %v465
        %v489 = vmul.f32 %v486, %v464
        %v490 = vmul.f32 %v486, %v463
        %v491 = vmul.f32 %v486, %v462
        %v492 = vmul.f32 %v486, %v461
        %v493 = vmul.f32 %v486, %v460
        %v494 = vmul.f32 %v486, %v459
        %v495 = vmul.f32 %v486, %v458
        %v496 = vadd.f32 %v418, %v487
        %v497 = vadd.f32 %v419, %v488
        %v498 = vadd.f32 %v420, %v489
        %v499 = vadd.f32 %v421, %v490
        %v500 = vadd.f32 %v422, %v491
        %v501 = vadd.f32 %v423, %v492
        %v502 = vadd.f32 %v424, %v493
        %v503 = vadd.f32 %v425, %v494
        %v504 = vadd.f32 %v426, %v495
        %v505 = vstv %s172
        %v506 = vmul.f32 %v505, %v466
        %v507 = vmul.f32 %v505, %v465
        %v508 = vmul.f32 %v505, %v464
        %v509 = vmul.f32 %v505, %v463
        %v510 = vmul.f32 %v505, %v462
        %v511 = vmul.f32 %v505, %v461
        %v512 = vmul.f32 %v505, %v460
        %v513 = vmul.f32 %v505, %v459
        %v514 = vmul.f32 %v505, %v458
        %v515 = vadd.f32 %v437, %v506
        %v516 = vadd.f32 %v438, %v507
        %v517 = vadd.f32 %v439, %v508
        %v518 = vadd.f32 %v440, %v509
        %v519 = vadd.f32 %v441, %v510
        %v520 = vadd.f32 %v442, %v511
        %v521 = vadd.f32 %v443, %v512
        %v522 = vadd.f32 %v444, %v513
        %v523 = vadd.f32 %v445, %v514
        %524 = vrot.lane.b32.xlu0 %v466, 1
        %v525 = vpop.permute.xlu0 %524
        %526 = vrot.lane.b32.xlu0 %v465, 1
        %v527 = vpop.permute.xlu0 %526
        %528 = vrot.lane.b32.xlu0 %v464, 1
        %v529 = vpop.permute.xlu0 %528
        %530 = vrot.lane.b32.xlu0 %v463, 1
        %v531 = vpop.permute.xlu0 %530
        %532 = vrot.lane.b32.xlu0 %v462, 1
        %v533 = vpop.permute.xlu0 %532
        %534 = vrot.lane.b32.xlu0 %v461, 1
        %v535 = vpop.permute.xlu0 %534
        %536 = vrot.lane.b32.xlu0 %v460, 1
        %v537 = vpop.permute.xlu0 %536
        %538 = vrot.lane.b32.xlu0 %v459, 1
        %v539 = vpop.permute.xlu0 %538
        %540 = vrot.lane.b32.xlu0 %v458, 1
        %v541 = vpop.permute.xlu0 %540
        %v542 = vstv %s147
        %v543 = vmul.f32 %v542, %v525
        %v544 = vmul.f32 %v542, %v527
        %v545 = vmul.f32 %v542, %v529
        %v546 = vmul.f32 %v542, %v531
        %v547 = vmul.f32 %v542, %v533
        %v548 = vmul.f32 %v542, %v535
        %v549 = vmul.f32 %v542, %v537
        %v550 = vmul.f32 %v542, %v539
        %v551 = vmul.f32 %v542, %v541
        %v552 = vadd.f32 %v477, %v543
        %v553 = vadd.f32 %v478, %v544
        %v554 = vadd.f32 %v479, %v545
        %v555 = vadd.f32 %v480, %v546
        %v556 = vadd.f32 %v481, %v547
        %v557 = vadd.f32 %v482, %v548
        %v558 = vadd.f32 %v483, %v549
        %v559 = vadd.f32 %v484, %v550
        %v560 = vadd.f32 %v485, %v551
        %v561 = vstv %s159
        %v562 = vmul.f32 %v561, %v525
        %v563 = vmul.f32 %v561, %v527
        %v564 = vmul.f32 %v561, %v529
        %v565 = vmul.f32 %v561, %v531
        %v566 = vmul.f32 %v561, %v533
        %v567 = vmul.f32 %v561, %v535
        %v568 = vmul.f32 %v561, %v537
        %v569 = vmul.f32 %v561, %v539
        %v570 = vmul.f32 %v561, %v541
        %v571 = vadd.f32 %v496, %v562
        %v572 = vadd.f32 %v497, %v563
        %v573 = vadd.f32 %v498, %v564
        %v574 = vadd.f32 %v499, %v565
        %v575 = vadd.f32 %v500, %v566
        %v576 = vadd.f32 %v501, %v567
        %v577 = vadd.f32 %v502, %v568
        %v578 = vadd.f32 %v503, %v569
        %v579 = vadd.f32 %v504, %v570
        %v580 = vstv %s171
        %v581 = vmul.f32 %v580, %v525
        %v582 = vmul.f32 %v580, %v527
        %v583 = vmul.f32 %v580, %v529
        %v584 = vmul.f32 %v580, %v531
        %v585 = vmul.f32 %v580, %v533
        %v586 = vmul.f32 %v580, %v535
        %v587 = vmul.f32 %v580, %v537
        %v588 = vmul.f32 %v580, %v539
        %v589 = vmul.f32 %v580, %v541
        %v590 = vadd.f32 %v515, %v581
        %v591 = vadd.f32 %v516, %v582
        %v592 = vadd.f32 %v517, %v583
        %v593 = vadd.f32 %v518, %v584
        %v594 = vadd.f32 %v519, %v585
        %v595 = vadd.f32 %v520, %v586
        %v596 = vadd.f32 %v521, %v587
        %v597 = vadd.f32 %v522, %v588
        %v598 = vadd.f32 %v523, %v589
        %v599 = vld [vmem:[%s275] sm:$0xff]
        %v600 = vld [vmem:[%s275 + $0x8] sm:$0xff]
        %v601 = vld [vmem:[%s275 + $0x10] sm:$0xff]
        %v602 = vld [vmem:[%s275 + $0x18] sm:$0xff]
        %v603 = vld [vmem:[%s275 + $0x20] sm:$0xff]
        %v604 = vld [vmem:[%s275 + $0x28] sm:$0xff]
        %v605 = vld [vmem:[%s275 + $0x30] sm:$0xff]
        %v606 = vld [vmem:[%s275 + $0x38] sm:$0xff]
        %v607 = vld [vmem:[%s275 + $0x40] sm:$0xff]
        %v608 = vstv %s154
        %v609 = vmul.f32 %v608, %v599
        %v610 = vmul.f32 %v608, %v600
        %v611 = vmul.f32 %v608, %v601
        %v612 = vmul.f32 %v608, %v602
        %v613 = vmul.f32 %v608, %v603
        %v614 = vmul.f32 %v608, %v604
        %v615 = vmul.f32 %v608, %v605
        %v616 = vmul.f32 %v608, %v606
        %v617 = vmul.f32 %v608, %v607
        %v618 = vadd.f32 %v552, %v609
        %v619 = vadd.f32 %v553, %v610
        %v620 = vadd.f32 %v554, %v611
        %v621 = vadd.f32 %v555, %v612
        %v622 = vadd.f32 %v556, %v613
        %v623 = vadd.f32 %v557, %v614
        %v624 = vadd.f32 %v558, %v615
        %v625 = vadd.f32 %v559, %v616
        %v626 = vadd.f32 %v560, %v617
        %v627 = vstv %s166
        %v628 = vmul.f32 %v627, %v599
        %v629 = vmul.f32 %v627, %v600
        %v630 = vmul.f32 %v627, %v601
        %v631 = vmul.f32 %v627, %v602
        %v632 = vmul.f32 %v627, %v603
        %v633 = vmul.f32 %v627, %v604
        %v634 = vmul.f32 %v627, %v605
        %v635 = vmul.f32 %v627, %v606
        %v636 = vmul.f32 %v627, %v607
        %v637 = vadd.f32 %v571, %v628
        %v638 = vadd.f32 %v572, %v629
        %v639 = vadd.f32 %v573, %v630
        %v640 = vadd.f32 %v574, %v631
        %v641 = vadd.f32 %v575, %v632
        %v642 = vadd.f32 %v576, %v633
        %v643 = vadd.f32 %v577, %v634
        %v644 = vadd.f32 %v578, %v635
        %v645 = vadd.f32 %v579, %v636
        %v646 = vstv %s178
        %v647 = vmul.f32 %v646, %v599
        %v648 = vmul.f32 %v646, %v600
        %v649 = vmul.f32 %v646, %v601
        %v650 = vmul.f32 %v646, %v602
        %v651 = vmul.f32 %v646, %v603
        %v652 = vmul.f32 %v646, %v604
        %v653 = vmul.f32 %v646, %v605
        %v654 = vmul.f32 %v646, %v606
        %v655 = vmul.f32 %v646, %v607
        %v656 = vadd.f32 %v590, %v647
        %v657 = vadd.f32 %v591, %v648
        %v658 = vadd.f32 %v592, %v649
        %v659 = vadd.f32 %v593, %v650
        %v660 = vadd.f32 %v594, %v651
        %v661 = vadd.f32 %v595, %v652
        %v662 = vadd.f32 %v596, %v653
        %v663 = vadd.f32 %v597, %v654
        %v664 = vadd.f32 %v598, %v655
        %665 = vrot.lane.b32.xlu0 %v599, 1
        %v666 = vpop.permute.xlu0 %665
        %667 = vrot.lane.b32.xlu0 %v600, 1
        %v668 = vpop.permute.xlu0 %667
        %669 = vrot.lane.b32.xlu0 %v601, 1
        %v670 = vpop.permute.xlu0 %669
        %671 = vrot.lane.b32.xlu0 %v602, 1
        %v672 = vpop.permute.xlu0 %671
        %673 = vrot.lane.b32.xlu0 %v603, 1
        %v674 = vpop.permute.xlu0 %673
        %675 = vrot.lane.b32.xlu0 %v604, 1
        %v676 = vpop.permute.xlu0 %675
        %677 = vrot.lane.b32.xlu0 %v605, 1
        %v678 = vpop.permute.xlu0 %677
        %679 = vrot.lane.b32.xlu0 %v606, 1
        %v680 = vpop.permute.xlu0 %679
        %681 = vrot.lane.b32.xlu0 %v607, 1
        %v682 = vpop.permute.xlu0 %681
        %v683 = vstv %s153
        %v684 = vmul.f32 %v683, %v666
        %v685 = vmul.f32 %v683, %v668
        %v686 = vmul.f32 %v683, %v670
        %v687 = vmul.f32 %v683, %v672
        %v688 = vmul.f32 %v683, %v674
        %v689 = vmul.f32 %v683, %v676
        %v690 = vmul.f32 %v683, %v678
        %v691 = vmul.f32 %v683, %v680
        %v692 = vmul.f32 %v683, %v682
        %v693 = vadd.f32 %v618, %v684
        %v694 = vadd.f32 %v619, %v685
        %v695 = vadd.f32 %v620, %v686
        %v696 = vadd.f32 %v621, %v687
        %v697 = vadd.f32 %v622, %v688
        %v698 = vadd.f32 %v623, %v689
        %v699 = vadd.f32 %v624, %v690
        %v700 = vadd.f32 %v625, %v691
        %v701 = vadd.f32 %v626, %v692
        %v702 = vstv %s165
        %v703 = vmul.f32 %v702, %v666
        %v704 = vmul.f32 %v702, %v668
        %v705 = vmul.f32 %v702, %v670
        %v706 = vmul.f32 %v702, %v672
        %v707 = vmul.f32 %v702, %v674
        %v708 = vmul.f32 %v702, %v676
        %v709 = vmul.f32 %v702, %v678
        %v710 = vmul.f32 %v702, %v680
        %v711 = vmul.f32 %v702, %v682
        %v712 = vadd.f32 %v637, %v703
        %v713 = vadd.f32 %v638, %v704
        %v714 = vadd.f32 %v639, %v705
        %v715 = vadd.f32 %v640, %v706
        %v716 = vadd.f32 %v641, %v707
        %v717 = vadd.f32 %v642, %v708
        %v718 = vadd.f32 %v643, %v709
        %v719 = vadd.f32 %v644, %v710
        %v720 = vadd.f32 %v645, %v711
        %v721 = vstv %s177
        %v722 = vmul.f32 %v721, %v666
        %v723 = vmul.f32 %v721, %v668
        %v724 = vmul.f32 %v721, %v670
        %v725 = vmul.f32 %v721, %v672
        %v726 = vmul.f32 %v721, %v674
        %v727 = vmul.f32 %v721, %v676
        %v728 = vmul.f32 %v721, %v678
        %v729 = vmul.f32 %v721, %v680
        %v730 = vmul.f32 %v721, %v682
        %v731 = vadd.f32 %v656, %v722
        %v732 = vadd.f32 %v657, %v723
        %v733 = vadd.f32 %v658, %v724
        %v734 = vadd.f32 %v659, %v725
        %v735 = vadd.f32 %v660, %v726
        %v736 = vadd.f32 %v661, %v727
        %v737 = vadd.f32 %v662, %v728
        %v738 = vadd.f32 %v663, %v729
        %v739 = vadd.f32 %v664, %v730
        %v740 = vrot.slane %v599, 7
        %v741 = vrot.slane %v600, 7
        %v742 = vrot.slane %v601, 7
        %v743 = vrot.slane %v602, 7
        %v744 = vrot.slane %v603, 7
        %v745 = vrot.slane %v604, 7
        %v746 = vrot.slane %v605, 7
        %v747 = vrot.slane %v606, 7
        %v748 = vrot.slane %v607, 7
        %v749 = vsel %vm457, %v747, %v748
        %v750 = vsel %vm457, %v746, %v747
        %v751 = vsel %vm457, %v745, %v746
        %v752 = vsel %vm457, %v744, %v745
        %v753 = vsel %vm457, %v743, %v744
        %v754 = vsel %vm457, %v742, %v743
        %v755 = vsel %vm457, %v741, %v742
        %v756 = vsel %vm457, %v740, %v741
        %v757 = vsel %vm457, %v748, %v740
        %v758 = vstv %s152
        %v759 = vmul.f32 %v758, %v757
        %v760 = vmul.f32 %v758, %v756
        %v761 = vmul.f32 %v758, %v755
        %v762 = vmul.f32 %v758, %v754
        %v763 = vmul.f32 %v758, %v753
        %v764 = vmul.f32 %v758, %v752
        %v765 = vmul.f32 %v758, %v751
        %v766 = vmul.f32 %v758, %v750
        %v767 = vmul.f32 %v758, %v749
        %v768 = vadd.f32 %v693, %v759
        %v769 = vadd.f32 %v694, %v760
        %v770 = vadd.f32 %v695, %v761
        %v771 = vadd.f32 %v696, %v762
        %v772 = vadd.f32 %v697, %v763
        %v773 = vadd.f32 %v698, %v764
        %v774 = vadd.f32 %v699, %v765
        %v775 = vadd.f32 %v700, %v766
        %v776 = vadd.f32 %v701, %v767
        %v777 = vstv %s164
        %v778 = vmul.f32 %v777, %v757
        %v779 = vmul.f32 %v777, %v756
        %v780 = vmul.f32 %v777, %v755
        %v781 = vmul.f32 %v777, %v754
        %v782 = vmul.f32 %v777, %v753
        %v783 = vmul.f32 %v777, %v752
        %v784 = vmul.f32 %v777, %v751
        %v785 = vmul.f32 %v777, %v750
        %v786 = vmul.f32 %v777, %v749
        %v787 = vadd.f32 %v712, %v778
        %v788 = vadd.f32 %v713, %v779
        %v789 = vadd.f32 %v714, %v780
        %v790 = vadd.f32 %v715, %v781
        %v791 = vadd.f32 %v716, %v782
        %v792 = vadd.f32 %v717, %v783
        %v793 = vadd.f32 %v718, %v784
        %v794 = vadd.f32 %v719, %v785
        %v795 = vadd.f32 %v720, %v786
        %v796 = vstv %s176
        %v797 = vmul.f32 %v796, %v757
        %v798 = vmul.f32 %v796, %v756
        %v799 = vmul.f32 %v796, %v755
        %v800 = vmul.f32 %v796, %v754
        %v801 = vmul.f32 %v796, %v753
        %v802 = vmul.f32 %v796, %v752
        %v803 = vmul.f32 %v796, %v751
        %v804 = vmul.f32 %v796, %v750
        %v805 = vmul.f32 %v796, %v749
        %v806 = vadd.f32 %v731, %v797
        %v807 = vadd.f32 %v732, %v798
        %v808 = vadd.f32 %v733, %v799
        %v809 = vadd.f32 %v734, %v800
        %v810 = vadd.f32 %v735, %v801
        %v811 = vadd.f32 %v736, %v802
        %v812 = vadd.f32 %v737, %v803
        %v813 = vadd.f32 %v738, %v804
        %v814 = vadd.f32 %v739, %v805
        %815 = vrot.lane.b32.xlu0 %v757, 1
        %v816 = vpop.permute.xlu0 %815
        %817 = vrot.lane.b32.xlu0 %v756, 1
        %v818 = vpop.permute.xlu0 %817
        %819 = vrot.lane.b32.xlu0 %v755, 1
        %v820 = vpop.permute.xlu0 %819
        %821 = vrot.lane.b32.xlu0 %v754, 1
        %v822 = vpop.permute.xlu0 %821
        %823 = vrot.lane.b32.xlu0 %v753, 1
        %v824 = vpop.permute.xlu0 %823
        %825 = vrot.lane.b32.xlu0 %v752, 1
        %v826 = vpop.permute.xlu0 %825
        %827 = vrot.lane.b32.xlu0 %v751, 1
        %v828 = vpop.permute.xlu0 %827
        %829 = vrot.lane.b32.xlu0 %v750, 1
        %v830 = vpop.permute.xlu0 %829
        %831 = vrot.lane.b32.xlu0 %v749, 1
        %v832 = vpop.permute.xlu0 %831
        %v833 = vstv %s151
        %v834 = vmul.f32 %v833, %v816
        %v835 = vmul.f32 %v833, %v818
        %v836 = vmul.f32 %v833, %v820
        %v837 = vmul.f32 %v833, %v822
        %v838 = vmul.f32 %v833, %v824
        %v839 = vmul.f32 %v833, %v826
        %v840 = vmul.f32 %v833, %v828
        %v841 = vmul.f32 %v833, %v830
        %v842 = vmul.f32 %v833, %v832
        %v843 = vadd.f32 %v768, %v834
        %v844 = vadd.f32 %v769, %v835
        %v845 = vadd.f32 %v770, %v836
        %v846 = vadd.f32 %v771, %v837
        %v847 = vadd.f32 %v772, %v838
        %v848 = vadd.f32 %v773, %v839
        %v849 = vadd.f32 %v774, %v840
        %v850 = vadd.f32 %v775, %v841
        %v851 = vadd.f32 %v776, %v842
        %v852 = vstv %s163
        %v853 = vmul.f32 %v852, %v816
        %v854 = vmul.f32 %v852, %v818
        %v855 = vmul.f32 %v852, %v820
        %v856 = vmul.f32 %v852, %v822
        %v857 = vmul.f32 %v852, %v824
        %v858 = vmul.f32 %v852, %v826
        %v859 = vmul.f32 %v852, %v828
        %v860 = vmul.f32 %v852, %v830
        %v861 = vmul.f32 %v852, %v832
        %v862 = vadd.f32 %v787, %v853
        %v863 = vadd.f32 %v788, %v854
        %v864 = vadd.f32 %v789, %v855
        %v865 = vadd.f32 %v790, %v856
        %v866 = vadd.f32 %v791, %v857
        %v867 = vadd.f32 %v792, %v858
        %v868 = vadd.f32 %v793, %v859
        %v869 = vadd.f32 %v794, %v860
        %v870 = vadd.f32 %v795, %v861
        %v871 = vstv %s175
        %v872 = vmul.f32 %v871, %v816
        %v873 = vmul.f32 %v871, %v818
        %v874 = vmul.f32 %v871, %v820
        %v875 = vmul.f32 %v871, %v822
        %v876 = vmul.f32 %v871, %v824
        %v877 = vmul.f32 %v871, %v826
        %v878 = vmul.f32 %v871, %v828
        %v879 = vmul.f32 %v871, %v830
        %v880 = vmul.f32 %v871, %v832
        %v881 = vadd.f32 %v806, %v872
        %v882 = vadd.f32 %v807, %v873
        %v883 = vadd.f32 %v808, %v874
        %v884 = vadd.f32 %v809, %v875
        %v885 = vadd.f32 %v810, %v876
        %v886 = vadd.f32 %v811, %v877
        %v887 = vadd.f32 %v812, %v878
        %v888 = vadd.f32 %v813, %v879
        %v889 = vadd.f32 %v814, %v880
        %v890 = vld [vmem:[%s293] sm:$0xff]
        %v891 = vld [vmem:[%s293 + $0x8] sm:$0xff]
        %v892 = vld [vmem:[%s293 + $0x10] sm:$0xff]
        %v893 = vld [vmem:[%s293 + $0x18] sm:$0xff]
        %v894 = vld [vmem:[%s293 + $0x20] sm:$0xff]
        %v895 = vld [vmem:[%s293 + $0x28] sm:$0xff]
        %v896 = vld [vmem:[%s293 + $0x30] sm:$0xff]
        %v897 = vld [vmem:[%s293 + $0x38] sm:$0xff]
        %v898 = vld [vmem:[%s293 + $0x40] sm:$0xff]
        %v899 = vstv %s158
        %v900 = vmul.f32 %v899, %v890
        %v901 = vmul.f32 %v899, %v891
        %v902 = vmul.f32 %v899, %v892
        %v903 = vmul.f32 %v899, %v893
        %v904 = vmul.f32 %v899, %v894
        %v905 = vmul.f32 %v899, %v895
        %v906 = vmul.f32 %v899, %v896
        %v907 = vmul.f32 %v899, %v897
        %v908 = vmul.f32 %v899, %v898
        %v909 = vadd.f32 %v843, %v900
        %v910 = vadd.f32 %v844, %v901
        %v911 = vadd.f32 %v845, %v902
        %v912 = vadd.f32 %v846, %v903
        %v913 = vadd.f32 %v847, %v904
        %v914 = vadd.f32 %v848, %v905
        %v915 = vadd.f32 %v849, %v906
        %v916 = vadd.f32 %v850, %v907
        %v917 = vadd.f32 %v851, %v908
        %v918 = vstv %s170
        %v919 = vmul.f32 %v918, %v890
        %v920 = vmul.f32 %v918, %v891
        %v921 = vmul.f32 %v918, %v892
        %v922 = vmul.f32 %v918, %v893
        %v923 = vmul.f32 %v918, %v894
        %v924 = vmul.f32 %v918, %v895
        %v925 = vmul.f32 %v918, %v896
        %v926 = vmul.f32 %v918, %v897
        %v927 = vmul.f32 %v918, %v898
        %v928 = vadd.f32 %v862, %v919
        %v929 = vadd.f32 %v863, %v920
        %v930 = vadd.f32 %v864, %v921
        %v931 = vadd.f32 %v865, %v922
        %v932 = vadd.f32 %v866, %v923
        %v933 = vadd.f32 %v867, %v924
        %v934 = vadd.f32 %v868, %v925
        %v935 = vadd.f32 %v869, %v926
        %v936 = vadd.f32 %v870, %v927
        %v937 = vstv %s182
        %v938 = vmul.f32 %v937, %v890
        %v939 = vmul.f32 %v937, %v891
        %v940 = vmul.f32 %v937, %v892
        %v941 = vmul.f32 %v937, %v893
        %v942 = vmul.f32 %v937, %v894
        %v943 = vmul.f32 %v937, %v895
        %v944 = vmul.f32 %v937, %v896
        %v945 = vmul.f32 %v937, %v897
        %v946 = vmul.f32 %v937, %v898
        %v947 = vadd.f32 %v881, %v938
        %v948 = vadd.f32 %v882, %v939
        %v949 = vadd.f32 %v883, %v940
        %v950 = vadd.f32 %v884, %v941
        %v951 = vadd.f32 %v885, %v942
        %v952 = vadd.f32 %v886, %v943
        %v953 = vadd.f32 %v887, %v944
        %v954 = vadd.f32 %v888, %v945
        %v955 = vadd.f32 %v889, %v946
        %956 = vrot.lane.b32.xlu0 %v890, 1
        %v957 = vpop.permute.xlu0 %956
        %958 = vrot.lane.b32.xlu0 %v891, 1
        %v959 = vpop.permute.xlu0 %958
        %960 = vrot.lane.b32.xlu0 %v892, 1
        %v961 = vpop.permute.xlu0 %960
        %962 = vrot.lane.b32.xlu0 %v893, 1
        %v963 = vpop.permute.xlu0 %962
        %964 = vrot.lane.b32.xlu0 %v894, 1
        %v965 = vpop.permute.xlu0 %964
        %966 = vrot.lane.b32.xlu0 %v895, 1
        %v967 = vpop.permute.xlu0 %966
        %968 = vrot.lane.b32.xlu0 %v896, 1
        %v969 = vpop.permute.xlu0 %968
        %970 = vrot.lane.b32.xlu0 %v897, 1
        %v971 = vpop.permute.xlu0 %970
        %972 = vrot.lane.b32.xlu0 %v898, 1
        %v973 = vpop.permute.xlu0 %972
        %v974 = vstv %s157
        %v975 = vmul.f32 %v974, %v957
        %v976 = vmul.f32 %v974, %v959
        %v977 = vmul.f32 %v974, %v961
        %v978 = vmul.f32 %v974, %v963
        %v979 = vmul.f32 %v974, %v965
        %v980 = vmul.f32 %v974, %v967
        %v981 = vmul.f32 %v974, %v969
        %v982 = vmul.f32 %v974, %v971
        %v983 = vmul.f32 %v974, %v973
        %v984 = vadd.f32 %v909, %v975
        %v985 = vadd.f32 %v910, %v976
        %v986 = vadd.f32 %v911, %v977
        %v987 = vadd.f32 %v912, %v978
        %v988 = vadd.f32 %v913, %v979
        %v989 = vadd.f32 %v914, %v980
        %v990 = vadd.f32 %v915, %v981
        %v991 = vadd.f32 %v916, %v982
        %v992 = vadd.f32 %v917, %v983
        %v993 = vstv %s169
        %v994 = vmul.f32 %v993, %v957
        %v995 = vmul.f32 %v993, %v959
        %v996 = vmul.f32 %v993, %v961
        %v997 = vmul.f32 %v993, %v963
        %v998 = vmul.f32 %v993, %v965
        %v999 = vmul.f32 %v993, %v967
        %v1000 = vmul.f32 %v993, %v969
        %v1001 = vmul.f32 %v993, %v971
        %v1002 = vmul.f32 %v993, %v973
        %v1003 = vadd.f32 %v928, %v994
        %v1004 = vadd.f32 %v929, %v995
        %v1005 = vadd.f32 %v930, %v996
        %v1006 = vadd.f32 %v931, %v997
        %v1007 = vadd.f32 %v932, %v998
        %v1008 = vadd.f32 %v933, %v999
        %v1009 = vadd.f32 %v934, %v1000
        %v1010 = vadd.f32 %v935, %v1001
        %v1011 = vadd.f32 %v936, %v1002
        %v1012 = vstv %s181
        %v1013 = vmul.f32 %v1012, %v957
        %v1014 = vmul.f32 %v1012, %v959
        %v1015 = vmul.f32 %v1012, %v961
        %v1016 = vmul.f32 %v1012, %v963
        %v1017 = vmul.f32 %v1012, %v965
        %v1018 = vmul.f32 %v1012, %v967
        %v1019 = vmul.f32 %v1012, %v969
        %v1020 = vmul.f32 %v1012, %v971
        %v1021 = vmul.f32 %v1012, %v973
        %v1022 = vadd.f32 %v947, %v1013
        %v1023 = vadd.f32 %v948, %v1014
        %v1024 = vadd.f32 %v949, %v1015
        %v1025 = vadd.f32 %v950, %v1016
        %v1026 = vadd.f32 %v951, %v1017
        %v1027 = vadd.f32 %v952, %v1018
        %v1028 = vadd.f32 %v953, %v1019
        %v1029 = vadd.f32 %v954, %v1020
        %v1030 = vadd.f32 %v955, %v1021
        %v1031 = vrot.slane %v890, 7
        %v1032 = vrot.slane %v891, 7
        %v1033 = vrot.slane %v892, 7
        %v1034 = vrot.slane %v893, 7
        %v1035 = vrot.slane %v894, 7
        %v1036 = vrot.slane %v895, 7
        %v1037 = vrot.slane %v896, 7
        %v1038 = vrot.slane %v897, 7
        %v1039 = vrot.slane %v898, 7
        %v1040 = vsel %vm457, %v1038, %v1039
        %v1041 = vsel %vm457, %v1037, %v1038
        %v1042 = vsel %vm457, %v1036, %v1037
        %v1043 = vsel %vm457, %v1035, %v1036
        %v1044 = vsel %vm457, %v1034, %v1035
        %v1045 = vsel %vm457, %v1033, %v1034
        %v1046 = vsel %vm457, %v1032, %v1033
        %v1047 = vsel %vm457, %v1031, %v1032
        %v1048 = vsel %vm457, %v1039, %v1031
        %v1049 = vstv %s156
        %v1050 = vmul.f32 %v1049, %v1048
        %v1051 = vmul.f32 %v1049, %v1047
        %v1052 = vmul.f32 %v1049, %v1046
        %v1053 = vmul.f32 %v1049, %v1045
        %v1054 = vmul.f32 %v1049, %v1044
        %v1055 = vmul.f32 %v1049, %v1043
        %v1056 = vmul.f32 %v1049, %v1042
        %v1057 = vmul.f32 %v1049, %v1041
        %v1058 = vmul.f32 %v1049, %v1040
        %v1059 = vadd.f32 %v984, %v1050
        %v1060 = vadd.f32 %v985, %v1051
        %v1061 = vadd.f32 %v986, %v1052
        %v1062 = vadd.f32 %v987, %v1053
        %v1063 = vadd.f32 %v988, %v1054
        %v1064 = vadd.f32 %v989, %v1055
        %v1065 = vadd.f32 %v990, %v1056
        %v1066 = vadd.f32 %v991, %v1057
        %v1067 = vadd.f32 %v992, %v1058
        %v1068 = vstv %s168
        %v1069 = vmul.f32 %v1068, %v1048
        %v1070 = vmul.f32 %v1068, %v1047
        %v1071 = vmul.f32 %v1068, %v1046
        %v1072 = vmul.f32 %v1068, %v1045
        %v1073 = vmul.f32 %v1068, %v1044
        %v1074 = vmul.f32 %v1068, %v1043
        %v1075 = vmul.f32 %v1068, %v1042
        %v1076 = vmul.f32 %v1068, %v1041
        %v1077 = vmul.f32 %v1068, %v1040
        %v1078 = vadd.f32 %v1003, %v1069
        %v1079 = vadd.f32 %v1004, %v1070
        %v1080 = vadd.f32 %v1005, %v1071
        %v1081 = vadd.f32 %v1006, %v1072
        %v1082 = vadd.f32 %v1007, %v1073
        %v1083 = vadd.f32 %v1008, %v1074
        %v1084 = vadd.f32 %v1009, %v1075
        %v1085 = vadd.f32 %v1010, %v1076
        %v1086 = vadd.f32 %v1011, %v1077
        %v1087 = vstv %s180
        %v1088 = vmul.f32 %v1087, %v1048
        %v1089 = vmul.f32 %v1087, %v1047
        %v1090 = vmul.f32 %v1087, %v1046
        %v1091 = vmul.f32 %v1087, %v1045
        %v1092 = vmul.f32 %v1087, %v1044
        %v1093 = vmul.f32 %v1087, %v1043
        %v1094 = vmul.f32 %v1087, %v1042
        %v1095 = vmul.f32 %v1087, %v1041
        %v1096 = vmul.f32 %v1087, %v1040
        %v1097 = vadd.f32 %v1022, %v1088
        %v1098 = vadd.f32 %v1023, %v1089
        %v1099 = vadd.f32 %v1024, %v1090
        %v1100 = vadd.f32 %v1025, %v1091
        %v1101 = vadd.f32 %v1026, %v1092
        %v1102 = vadd.f32 %v1027, %v1093
        %v1103 = vadd.f32 %v1028, %v1094
        %v1104 = vadd.f32 %v1029, %v1095
        %v1105 = vadd.f32 %v1030, %v1096
        %1106 = vrot.lane.b32.xlu0 %v1048, 1
        %v1107 = vpop.permute.xlu0 %1106
        %1108 = vrot.lane.b32.xlu0 %v1047, 1
        %v1109 = vpop.permute.xlu0 %1108
        %1110 = vrot.lane.b32.xlu0 %v1046, 1
        %v1111 = vpop.permute.xlu0 %1110
        %1112 = vrot.lane.b32.xlu0 %v1045, 1
        %v1113 = vpop.permute.xlu0 %1112
        %1114 = vrot.lane.b32.xlu0 %v1044, 1
        %v1115 = vpop.permute.xlu0 %1114
        %1116 = vrot.lane.b32.xlu0 %v1043, 1
        %v1117 = vpop.permute.xlu0 %1116
        %1118 = vrot.lane.b32.xlu0 %v1042, 1
        %v1119 = vpop.permute.xlu0 %1118
        %1120 = vrot.lane.b32.xlu0 %v1041, 1
        %v1121 = vpop.permute.xlu0 %1120
        %1122 = vrot.lane.b32.xlu0 %v1040, 1
        %v1123 = vpop.permute.xlu0 %1122
        %v1124 = vstv %s155
        %v1125 = vmul.f32 %v1124, %v1107
        %v1126 = vmul.f32 %v1124, %v1109
        %v1127 = vmul.f32 %v1124, %v1111
        %v1128 = vmul.f32 %v1124, %v1113
        %v1129 = vmul.f32 %v1124, %v1115
        %v1130 = vmul.f32 %v1124, %v1117
        %v1131 = vmul.f32 %v1124, %v1119
        %v1132 = vmul.f32 %v1124, %v1121
        %v1133 = vmul.f32 %v1124, %v1123
        %v1134 = vadd.f32 %v1059, %v1125
        %v1135 = vadd.f32 %v1060, %v1126
        %v1136 = vadd.f32 %v1061, %v1127
        %v1137 = vadd.f32 %v1062, %v1128
        %v1138 = vadd.f32 %v1063, %v1129
        %v1139 = vadd.f32 %v1064, %v1130
        %v1140 = vadd.f32 %v1065, %v1131
        %v1141 = vadd.f32 %v1066, %v1132
        %v1142 = vadd.f32 %v1067, %v1133
        %v1143 = vstv %s167
        %v1144 = vmul.f32 %v1143, %v1107
        %v1145 = vmul.f32 %v1143, %v1109
        %v1146 = vmul.f32 %v1143, %v1111
        %v1147 = vmul.f32 %v1143, %v1113
        %v1148 = vmul.f32 %v1143, %v1115
        %v1149 = vmul.f32 %v1143, %v1117
        %v1150 = vmul.f32 %v1143, %v1119
        %v1151 = vmul.f32 %v1143, %v1121
        %v1152 = vmul.f32 %v1143, %v1123
        %v1153 = vadd.f32 %v1078, %v1144
        %v1154 = vadd.f32 %v1079, %v1145
        %v1155 = vadd.f32 %v1080, %v1146
        %v1156 = vadd.f32 %v1081, %v1147
        %v1157 = vadd.f32 %v1082, %v1148
        %v1158 = vadd.f32 %v1083, %v1149
        %v1159 = vadd.f32 %v1084, %v1150
        %v1160 = vadd.f32 %v1085, %v1151
        %v1161 = vadd.f32 %v1086, %v1152
        %v1162 = vstv %s179
        %v1163 = vmul.f32 %v1162, %v1107
        %v1164 = vmul.f32 %v1162, %v1109
        %v1165 = vmul.f32 %v1162, %v1111
        %v1166 = vmul.f32 %v1162, %v1113
        %v1167 = vmul.f32 %v1162, %v1115
        %v1168 = vmul.f32 %v1162, %v1117
        %v1169 = vmul.f32 %v1162, %v1119
        %v1170 = vmul.f32 %v1162, %v1121
        %v1171 = vmul.f32 %v1162, %v1123
        %v1172 = vadd.f32 %v1097, %v1163
        %v1173 = vadd.f32 %v1098, %v1164
        %v1174 = vadd.f32 %v1099, %v1165
        %v1175 = vadd.f32 %v1100, %v1166
        %v1176 = vadd.f32 %v1101, %v1167
        %v1177 = vadd.f32 %v1102, %v1168
        %v1178 = vadd.f32 %v1103, %v1169
        %v1179 = vadd.f32 %v1104, %v1170
        %v1180 = vadd.f32 %v1105, %v1171
        %v1181 = vadd.s32 %v456, 8
        %v1182 = vadd.s32 %v456, 16
        %v1183 = vadd.s32 %v456, 24
        %v1184 = vadd.s32 %v456, 32
        %v1185 = vadd.s32 %v456, 40
        %v1186 = vadd.s32 %v456, 48
        %v1187 = vadd.s32 %v456, 56
        %v1188 = vadd.s32 %v456, 64
        %v1189 = vlaneseq
        %v1190 = vand.u32 %v1189, 127
        %vm1191 = vcmp.lt.s32.totalorder %v456, 65
        %vm1192 = vcmp.lt.s32.totalorder %v1181, 65
        %vm1193 = vcmp.lt.s32.totalorder %v1182, 65
        %vm1194 = vcmp.lt.s32.totalorder %v1183, 65
        %vm1195 = vcmp.lt.s32.totalorder %v1184, 65
        %vm1196 = vcmp.lt.s32.totalorder %v1185, 65
        %vm1197 = vcmp.lt.s32.totalorder %v1186, 65
        %vm1198 = vcmp.lt.s32.totalorder %v1187, 65
        %vm1199 = vcmp.lt.s32.totalorder %v1188, 65
        %vm1200 = vcmp.lt.s32.totalorder %v1190, 65
        %vm1201 = vmand %vm1191, %vm1200
        %vm1202 = vmand %vm1192, %vm1200
        %vm1203 = vmand %vm1193, %vm1200
        %vm1204 = vmand %vm1194, %vm1200
        %vm1205 = vmand %vm1195, %vm1200
        %vm1206 = vmand %vm1196, %vm1200
        %vm1207 = vmand %vm1197, %vm1200
        %vm1208 = vmand %vm1198, %vm1200
        %vm1209 = vmand %vm1199, %vm1200
        %v1210 = vsel %vm1201, 1.0, 0.0
        %v1211 = vsel %vm1202, 1.0, 0.0
        %v1212 = vsel %vm1203, 1.0, 0.0
        %v1213 = vsel %vm1204, 1.0, 0.0
        %v1214 = vsel %vm1205, 1.0, 0.0
        %v1215 = vsel %vm1206, 1.0, 0.0
        %v1216 = vsel %vm1207, 1.0, 0.0
        %v1217 = vsel %vm1208, 1.0, 0.0
        %v1218 = vsel %vm1209, 1.0, 0.0
        %v1219 = vadd.f32 %v1134, 3.0
        %v1220 = vadd.f32 %v1135, 3.0
        %v1221 = vadd.f32 %v1136, 3.0
        %v1222 = vadd.f32 %v1137, 3.0
        %v1223 = vadd.f32 %v1138, 3.0
        %v1224 = vadd.f32 %v1139, 3.0
        %v1225 = vadd.f32 %v1140, 3.0
        %v1226 = vadd.f32 %v1141, 3.0
        %v1227 = vadd.f32 %v1142, 3.0
        %v1228 = vmax.f32 %v1219, 0.0
        %v1229 = vmax.f32 %v1220, 0.0
        %v1230 = vmax.f32 %v1221, 0.0
        %v1231 = vmax.f32 %v1222, 0.0
        %v1232 = vmax.f32 %v1223, 0.0
        %v1233 = vmax.f32 %v1224, 0.0
        %v1234 = vmax.f32 %v1225, 0.0
        %v1235 = vmax.f32 %v1226, 0.0
        %v1236 = vmax.f32 %v1227, 0.0
        %v1237 = vmin.f32 %v1228, 6.0
        %v1238 = vmin.f32 %v1229, 6.0
        %v1239 = vmin.f32 %v1230, 6.0
        %v1240 = vmin.f32 %v1231, 6.0
        %v1241 = vmin.f32 %v1232, 6.0
        %v1242 = vmin.f32 %v1233, 6.0
        %v1243 = vmin.f32 %v1234, 6.0
        %v1244 = vmin.f32 %v1235, 6.0
        %v1245 = vmin.f32 %v1236, 6.0
        %v1246 = vmul.f32 %v1134, %v1237
        %v1247 = vmul.f32 %v1135, %v1238
        %v1248 = vmul.f32 %v1136, %v1239
        %v1249 = vmul.f32 %v1137, %v1240
        %v1250 = vmul.f32 %v1138, %v1241
        %v1251 = vmul.f32 %v1139, %v1242
        %v1252 = vmul.f32 %v1140, %v1243
        %v1253 = vmul.f32 %v1141, %v1244
        %v1254 = vmul.f32 %v1142, %v1245
        %v1255 = vmul.f32 %v1246, %v1210
        %v1256 = vmul.f32 %v1247, %v1211
        %v1257 = vmul.f32 %v1248, %v1212
        %v1258 = vmul.f32 %v1249, %v1213
        %v1259 = vmul.f32 %v1250, %v1214
        %v1260 = vmul.f32 %v1251, %v1215
        %v1261 = vmul.f32 %v1252, %v1216
        %v1262 = vmul.f32 %v1253, %v1217
        %v1263 = vmul.f32 %v1254, %v1218
        %1264 = vst [vmem:[#allocation3] sm:$0xff] %v1255
        %1265 = vst [vmem:[#allocation3 + $0x8] sm:$0xff] %v1256
        %1266 = vst [vmem:[#allocation3 + $0x10] sm:$0xff] %v1257
        %1267 = vst [vmem:[#allocation3 + $0x18] sm:$0xff] %v1258
        %1268 = vst [vmem:[#allocation3 + $0x20] sm:$0xff] %v1259
        %1269 = vst [vmem:[#allocation3 + $0x28] sm:$0xff] %v1260
        %1270 = vst [vmem:[#allocation3 + $0x30] sm:$0xff] %v1261
        %1271 = vst [vmem:[#allocation3 + $0x38] sm:$0xff] %v1262
        %1272 = vst [vmem:[#allocation3 + $0x40] sm:$0xff] %v1263
        %v1273 = vadd.f32 %v1153, 3.0
        %v1274 = vadd.f32 %v1154, 3.0
        %v1275 = vadd.f32 %v1155, 3.0
        %v1276 = vadd.f32 %v1156, 3.0
        %v1277 = vadd.f32 %v1157, 3.0
        %v1278 = vadd.f32 %v1158, 3.0
        %v1279 = vadd.f32 %v1159, 3.0
        %v1280 = vadd.f32 %v1160, 3.0
        %v1281 = vadd.f32 %v1161, 3.0
        %v1282 = vmax.f32 %v1273, 0.0
        %v1283 = vmax.f32 %v1274, 0.0
        %v1284 = vmax.f32 %v1275, 0.0
        %v1285 = vmax.f32 %v1276, 0.0
        %v1286 = vmax.f32 %v1277, 0.0
        %v1287 = vmax.f32 %v1278, 0.0
        %v1288 = vmax.f32 %v1279, 0.0
        %v1289 = vmax.f32 %v1280, 0.0
        %v1290 = vmax.f32 %v1281, 0.0
        %v1291 = vmin.f32 %v1282, 6.0
        %v1292 = vmin.f32 %v1283, 6.0
        %v1293 = vmin.f32 %v1284, 6.0
        %v1294 = vmin.f32 %v1285, 6.0
        %v1295 = vmin.f32 %v1286, 6.0
        %v1296 = vmin.f32 %v1287, 6.0
        %v1297 = vmin.f32 %v1288, 6.0
        %v1298 = vmin.f32 %v1289, 6.0
        %v1299 = vmin.f32 %v1290, 6.0
        %v1300 = vmul.f32 %v1153, %v1291
        %v1301 = vmul.f32 %v1154, %v1292
        %v1302 = vmul.f32 %v1155, %v1293
        %v1303 = vmul.f32 %v1156, %v1294
        %v1304 = vmul.f32 %v1157, %v1295
        %v1305 = vmul.f32 %v1158, %v1296
        %v1306 = vmul.f32 %v1159, %v1297
        %v1307 = vmul.f32 %v1160, %v1298
        %v1308 = vmul.f32 %v1161, %v1299
        %v1309 = vmul.f32 %v1300, %v1210
        %v1310 = vmul.f32 %v1301, %v1211
        %v1311 = vmul.f32 %v1302, %v1212
        %v1312 = vmul.f32 %v1303, %v1213
        %v1313 = vmul.f32 %v1304, %v1214
        %v1314 = vmul.f32 %v1305, %v1215
        %v1315 = vmul.f32 %v1306, %v1216
        %v1316 = vmul.f32 %v1307, %v1217
        %v1317 = vmul.f32 %v1308, %v1218
        %s1318 = scalar_lea.vmem [#allocation3], 72
        %1319 = vst [vmem:[%s1318] sm:$0xff] %v1309
        %1320 = vst [vmem:[%s1318 + $0x8] sm:$0xff] %v1310
        %1321 = vst [vmem:[%s1318 + $0x10] sm:$0xff] %v1311
        %1322 = vst [vmem:[%s1318 + $0x18] sm:$0xff] %v1312
        %1323 = vst [vmem:[%s1318 + $0x20] sm:$0xff] %v1313
        %1324 = vst [vmem:[%s1318 + $0x28] sm:$0xff] %v1314
        %1325 = vst [vmem:[%s1318 + $0x30] sm:$0xff] %v1315
        %1326 = vst [vmem:[%s1318 + $0x38] sm:$0xff] %v1316
        %1327 = vst [vmem:[%s1318 + $0x40] sm:$0xff] %v1317
        %v1328 = vadd.f32 %v1172, 3.0
        %v1329 = vadd.f32 %v1173, 3.0
        %v1330 = vadd.f32 %v1174, 3.0
        %v1331 = vadd.f32 %v1175, 3.0
        %v1332 = vadd.f32 %v1176, 3.0
        %v1333 = vadd.f32 %v1177, 3.0
        %v1334 = vadd.f32 %v1178, 3.0
        %v1335 = vadd.f32 %v1179, 3.0
        %v1336 = vadd.f32 %v1180, 3.0
        %v1337 = vmax.f32 %v1328, 0.0
        %v1338 = vmax.f32 %v1329, 0.0
        %v1339 = vmax.f32 %v1330, 0.0
        %v1340 = vmax.f32 %v1331, 0.0
        %v1341 = vmax.f32 %v1332, 0.0
        %v1342 = vmax.f32 %v1333, 0.0
        %v1343 = vmax.f32 %v1334, 0.0
        %v1344 = vmax.f32 %v1335, 0.0
        %v1345 = vmax.f32 %v1336, 0.0
        %v1346 = vmin.f32 %v1337, 6.0
        %v1347 = vmin.f32 %v1338, 6.0
        %v1348 = vmin.f32 %v1339, 6.0
        %v1349 = vmin.f32 %v1340, 6.0
        %v1350 = vmin.f32 %v1341, 6.0
        %v1351 = vmin.f32 %v1342, 6.0
        %v1352 = vmin.f32 %v1343, 6.0
        %v1353 = vmin.f32 %v1344, 6.0
        %v1354 = vmin.f32 %v1345, 6.0
        %v1355 = vmul.f32 %v1172, %v1346
        %v1356 = vmul.f32 %v1173, %v1347
        %v1357 = vmul.f32 %v1174, %v1348
        %v1358 = vmul.f32 %v1175, %v1349
        %v1359 = vmul.f32 %v1176, %v1350
        %v1360 = vmul.f32 %v1177, %v1351
        %v1361 = vmul.f32 %v1178, %v1352
        %v1362 = vmul.f32 %v1179, %v1353
        %v1363 = vmul.f32 %v1180, %v1354
        %v1364 = vmul.f32 %v1355, %v1210
        %v1365 = vmul.f32 %v1356, %v1211
        %v1366 = vmul.f32 %v1357, %v1212
        %v1367 = vmul.f32 %v1358, %v1213
        %v1368 = vmul.f32 %v1359, %v1214
        %v1369 = vmul.f32 %v1360, %v1215
        %v1370 = vmul.f32 %v1361, %v1216
        %v1371 = vmul.f32 %v1362, %v1217
        %v1372 = vmul.f32 %v1363, %v1218
        %s1373 = scalar_lea.vmem [#allocation3], 144
        %1374 = vst [vmem:[%s1373] sm:$0xff] %v1364
        %1375 = vst [vmem:[%s1373 + $0x8] sm:$0xff] %v1365
        %1376 = vst [vmem:[%s1373 + $0x10] sm:$0xff] %v1366
        %1377 = vst [vmem:[%s1373 + $0x18] sm:$0xff] %v1367
        %1378 = vst [vmem:[%s1373 + $0x20] sm:$0xff] %v1368
        %1379 = vst [vmem:[%s1373 + $0x28] sm:$0xff] %v1369
        %1380 = vst [vmem:[%s1373 + $0x30] sm:$0xff] %v1370
        %1381 = vst [vmem:[%s1373 + $0x38] sm:$0xff] %v1371
        %1382 = vst [vmem:[%s1373 + $0x40] sm:$0xff] %v1372
        %v1383 = vld [vmem:[#allocation3] sm:$0xff]
        %v1384 = vld [vmem:[#allocation3 + $0x8] sm:$0xff]
        %v1385 = vld [vmem:[#allocation3 + $0x10] sm:$0xff]
        %v1386 = vld [vmem:[#allocation3 + $0x18] sm:$0xff]
        %v1387 = vld [vmem:[#allocation3 + $0x20] sm:$0xff]
        %v1388 = vld [vmem:[#allocation3 + $0x28] sm:$0xff]
        %v1389 = vld [vmem:[#allocation3 + $0x30] sm:$0xff]
        %v1390 = vld [vmem:[#allocation3 + $0x38] sm:$0xff]
        %v1391 = vld [vmem:[#allocation3 + $0x40] sm:$0xff]
        %v1392 = vstv %s186
        %v1393 = vmul.f32 %v1392, %v1383
        %v1394 = vmul.f32 %v1392, %v1384
        %v1395 = vmul.f32 %v1392, %v1385
        %v1396 = vmul.f32 %v1392, %v1386
        %v1397 = vmul.f32 %v1392, %v1387
        %v1398 = vmul.f32 %v1392, %v1388
        %v1399 = vmul.f32 %v1392, %v1389
        %v1400 = vmul.f32 %v1392, %v1390
        %v1401 = vmul.f32 %v1392, %v1391
        %v1402 = vadd.f32 %v302, %v1393
        %v1403 = vadd.f32 %v302, %v1394
        %v1404 = vadd.f32 %v302, %v1395
        %v1405 = vadd.f32 %v302, %v1396
        %v1406 = vadd.f32 %v302, %v1397
        %v1407 = vadd.f32 %v302, %v1398
        %v1408 = vadd.f32 %v302, %v1399
        %v1409 = vadd.f32 %v302, %v1400
        %v1410 = vadd.f32 %v302, %v1401
        %v1411 = vstv %s198
        %v1412 = vmul.f32 %v1411, %v1383
        %v1413 = vmul.f32 %v1411, %v1384
        %v1414 = vmul.f32 %v1411, %v1385
        %v1415 = vmul.f32 %v1411, %v1386
        %v1416 = vmul.f32 %v1411, %v1387
        %v1417 = vmul.f32 %v1411, %v1388
        %v1418 = vmul.f32 %v1411, %v1389
        %v1419 = vmul.f32 %v1411, %v1390
        %v1420 = vmul.f32 %v1411, %v1391
        %v1421 = vadd.f32 %v303, %v1412
        %v1422 = vadd.f32 %v303, %v1413
        %v1423 = vadd.f32 %v303, %v1414
        %v1424 = vadd.f32 %v303, %v1415
        %v1425 = vadd.f32 %v303, %v1416
        %v1426 = vadd.f32 %v303, %v1417
        %v1427 = vadd.f32 %v303, %v1418
        %v1428 = vadd.f32 %v303, %v1419
        %v1429 = vadd.f32 %v303, %v1420
        %v1430 = vstv %s210
        %v1431 = vmul.f32 %v1430, %v1383
        %v1432 = vmul.f32 %v1430, %v1384
        %v1433 = vmul.f32 %v1430, %v1385
        %v1434 = vmul.f32 %v1430, %v1386
        %v1435 = vmul.f32 %v1430, %v1387
        %v1436 = vmul.f32 %v1430, %v1388
        %v1437 = vmul.f32 %v1430, %v1389
        %v1438 = vmul.f32 %v1430, %v1390
        %v1439 = vmul.f32 %v1430, %v1391
        %v1440 = vadd.f32 %v304, %v1431
        %v1441 = vadd.f32 %v304, %v1432
        %v1442 = vadd.f32 %v304, %v1433
        %v1443 = vadd.f32 %v304, %v1434
        %v1444 = vadd.f32 %v304, %v1435
        %v1445 = vadd.f32 %v304, %v1436
        %v1446 = vadd.f32 %v304, %v1437
        %v1447 = vadd.f32 %v304, %v1438
        %v1448 = vadd.f32 %v304, %v1439
        %1449 = vrot.lane.b32.xlu0 %v1383, 1
        %v1450 = vpop.permute.xlu0 %1449
        %1451 = vrot.lane.b32.xlu0 %v1384, 1
        %v1452 = vpop.permute.xlu0 %1451
        %1453 = vrot.lane.b32.xlu0 %v1385, 1
        %v1454 = vpop.permute.xlu0 %1453
        %1455 = vrot.lane.b32.xlu0 %v1386, 1
        %v1456 = vpop.permute.xlu0 %1455
        %1457 = vrot.lane.b32.xlu0 %v1387, 1
        %v1458 = vpop.permute.xlu0 %1457
        %1459 = vrot.lane.b32.xlu0 %v1388, 1
        %v1460 = vpop.permute.xlu0 %1459
        %1461 = vrot.lane.b32.xlu0 %v1389, 1
        %v1462 = vpop.permute.xlu0 %1461
        %1463 = vrot.lane.b32.xlu0 %v1390, 1
        %v1464 = vpop.permute.xlu0 %1463
        %1465 = vrot.lane.b32.xlu0 %v1391, 1
        %v1466 = vpop.permute.xlu0 %1465
        %v1467 = vstv %s185
        %v1468 = vmul.f32 %v1467, %v1450
        %v1469 = vmul.f32 %v1467, %v1452
        %v1470 = vmul.f32 %v1467, %v1454
        %v1471 = vmul.f32 %v1467, %v1456
        %v1472 = vmul.f32 %v1467, %v1458
        %v1473 = vmul.f32 %v1467, %v1460
        %v1474 = vmul.f32 %v1467, %v1462
        %v1475 = vmul.f32 %v1467, %v1464
        %v1476 = vmul.f32 %v1467, %v1466
        %v1477 = vadd.f32 %v1402, %v1468
        %v1478 = vadd.f32 %v1403, %v1469
        %v1479 = vadd.f32 %v1404, %v1470
        %v1480 = vadd.f32 %v1405, %v1471
        %v1481 = vadd.f32 %v1406, %v1472
        %v1482 = vadd.f32 %v1407, %v1473
        %v1483 = vadd.f32 %v1408, %v1474
        %v1484 = vadd.f32 %v1409, %v1475
        %v1485 = vadd.f32 %v1410, %v1476
        %v1486 = vstv %s197
        %v1487 = vmul.f32 %v1486, %v1450
        %v1488 = vmul.f32 %v1486, %v1452
        %v1489 = vmul.f32 %v1486, %v1454
        %v1490 = vmul.f32 %v1486, %v1456
        %v1491 = vmul.f32 %v1486, %v1458
        %v1492 = vmul.f32 %v1486, %v1460
        %v1493 = vmul.f32 %v1486, %v1462
        %v1494 = vmul.f32 %v1486, %v1464
        %v1495 = vmul.f32 %v1486, %v1466
        %v1496 = vadd.f32 %v1421, %v1487
        %v1497 = vadd.f32 %v1422, %v1488
        %v1498 = vadd.f32 %v1423, %v1489
        %v1499 = vadd.f32 %v1424, %v1490
        %v1500 = vadd.f32 %v1425, %v1491
        %v1501 = vadd.f32 %v1426, %v1492
        %v1502 = vadd.f32 %v1427, %v1493
        %v1503 = vadd.f32 %v1428, %v1494
        %v1504 = vadd.f32 %v1429, %v1495
        %v1505 = vstv %s209
        %v1506 = vmul.f32 %v1505, %v1450
        %v1507 = vmul.f32 %v1505, %v1452
        %v1508 = vmul.f32 %v1505, %v1454
        %v1509 = vmul.f32 %v1505, %v1456
        %v1510 = vmul.f32 %v1505, %v1458
        %v1511 = vmul.f32 %v1505, %v1460
        %v1512 = vmul.f32 %v1505, %v1462
        %v1513 = vmul.f32 %v1505, %v1464
        %v1514 = vmul.f32 %v1505, %v1466
        %v1515 = vadd.f32 %v1440, %v1506
        %v1516 = vadd.f32 %v1441, %v1507
        %v1517 = vadd.f32 %v1442, %v1508
        %v1518 = vadd.f32 %v1443, %v1509
        %v1519 = vadd.f32 %v1444, %v1510
        %v1520 = vadd.f32 %v1445, %v1511
        %v1521 = vadd.f32 %v1446, %v1512
        %v1522 = vadd.f32 %v1447, %v1513
        %v1523 = vadd.f32 %v1448, %v1514
        %v1524 = vrot.slane %v1383, 7
        %v1525 = vrot.slane %v1384, 7
        %v1526 = vrot.slane %v1385, 7
        %v1527 = vrot.slane %v1386, 7
        %v1528 = vrot.slane %v1387, 7
        %v1529 = vrot.slane %v1388, 7
        %v1530 = vrot.slane %v1389, 7
        %v1531 = vrot.slane %v1390, 7
        %v1532 = vrot.slane %v1391, 7
        %v1533 = vsel %vm457, %v1531, %v1532
        %v1534 = vsel %vm457, %v1530, %v1531
        %v1535 = vsel %vm457, %v1529, %v1530
        %v1536 = vsel %vm457, %v1528, %v1529
        %v1537 = vsel %vm457, %v1527, %v1528
        %v1538 = vsel %vm457, %v1526, %v1527
        %v1539 = vsel %vm457, %v1525, %v1526
        %v1540 = vsel %vm457, %v1524, %v1525
        %v1541 = vsel %vm457, %v1532, %v1524
        %v1542 = vstv %s184
        %v1543 = vmul.f32 %v1542, %v1541
        %v1544 = vmul.f32 %v1542, %v1540
        %v1545 = vmul.f32 %v1542, %v1539
        %v1546 = vmul.f32 %v1542, %v1538
        %v1547 = vmul.f32 %v1542, %v1537
        %v1548 = vmul.f32 %v1542, %v1536
        %v1549 = vmul.f32 %v1542, %v1535
        %v1550 = vmul.f32 %v1542, %v1534
        %v1551 = vmul.f32 %v1542, %v1533
        %v1552 = vadd.f32 %v1477, %v1543
        %v1553 = vadd.f32 %v1478, %v1544
        %v1554 = vadd.f32 %v1479, %v1545
        %v1555 = vadd.f32 %v1480, %v1546
        %v1556 = vadd.f32 %v1481, %v1547
        %v1557 = vadd.f32 %v1482, %v1548
        %v1558 = vadd.f32 %v1483, %v1549
        %v1559 = vadd.f32 %v1484, %v1550
        %v1560 = vadd.f32 %v1485, %v1551
        %v1561 = vstv %s196
        %v1562 = vmul.f32 %v1561, %v1541
        %v1563 = vmul.f32 %v1561, %v1540
        %v1564 = vmul.f32 %v1561, %v1539
        %v1565 = vmul.f32 %v1561, %v1538
        %v1566 = vmul.f32 %v1561, %v1537
        %v1567 = vmul.f32 %v1561, %v1536
        %v1568 = vmul.f32 %v1561, %v1535
        %v1569 = vmul.f32 %v1561, %v1534
        %v1570 = vmul.f32 %v1561, %v1533
        %v1571 = vadd.f32 %v1496, %v1562
        %v1572 = vadd.f32 %v1497, %v1563
        %v1573 = vadd.f32 %v1498, %v1564
        %v1574 = vadd.f32 %v1499, %v1565
        %v1575 = vadd.f32 %v1500, %v1566
        %v1576 = vadd.f32 %v1501, %v1567
        %v1577 = vadd.f32 %v1502, %v1568
        %v1578 = vadd.f32 %v1503, %v1569
        %v1579 = vadd.f32 %v1504, %v1570
        %v1580 = vstv %s208
        %v1581 = vmul.f32 %v1580, %v1541
        %v1582 = vmul.f32 %v1580, %v1540
        %v1583 = vmul.f32 %v1580, %v1539
        %v1584 = vmul.f32 %v1580, %v1538
        %v1585 = vmul.f32 %v1580, %v1537
        %v1586 = vmul.f32 %v1580, %v1536
        %v1587 = vmul.f32 %v1580, %v1535
        %v1588 = vmul.f32 %v1580, %v1534
        %v1589 = vmul.f32 %v1580, %v1533
        %v1590 = vadd.f32 %v1515, %v1581
        %v1591 = vadd.f32 %v1516, %v1582
        %v1592 = vadd.f32 %v1517, %v1583
        %v1593 = vadd.f32 %v1518, %v1584
        %v1594 = vadd.f32 %v1519, %v1585
        %v1595 = vadd.f32 %v1520, %v1586
        %v1596 = vadd.f32 %v1521, %v1587
        %v1597 = vadd.f32 %v1522, %v1588
        %v1598 = vadd.f32 %v1523, %v1589
        %1599 = vrot.lane.b32.xlu0 %v1541, 1
        %v1600 = vpop.permute.xlu0 %1599
        %1601 = vrot.lane.b32.xlu0 %v1540, 1
        %v1602 = vpop.permute.xlu0 %1601
        %1603 = vrot.lane.b32.xlu0 %v1539, 1
        %v1604 = vpop.permute.xlu0 %1603
        %1605 = vrot.lane.b32.xlu0 %v1538, 1
        %v1606 = vpop.permute.xlu0 %1605
        %1607 = vrot.lane.b32.xlu0 %v1537, 1
        %v1608 = vpop.permute.xlu0 %1607
        %1609 = vrot.lane.b32.xlu0 %v1536, 1
        %v1610 = vpop.permute.xlu0 %1609
        %1611 = vrot.lane.b32.xlu0 %v1535, 1
        %v1612 = vpop.permute.xlu0 %1611
        %1613 = vrot.lane.b32.xlu0 %v1534, 1
        %v1614 = vpop.permute.xlu0 %1613
        %1615 = vrot.lane.b32.xlu0 %v1533, 1
        %v1616 = vpop.permute.xlu0 %1615
        %v1617 = vstv %s183
        %v1618 = vmul.f32 %v1617, %v1600
        %v1619 = vmul.f32 %v1617, %v1602
        %v1620 = vmul.f32 %v1617, %v1604
        %v1621 = vmul.f32 %v1617, %v1606
        %v1622 = vmul.f32 %v1617, %v1608
        %v1623 = vmul.f32 %v1617, %v1610
        %v1624 = vmul.f32 %v1617, %v1612
        %v1625 = vmul.f32 %v1617, %v1614
        %v1626 = vmul.f32 %v1617, %v1616
        %v1627 = vadd.f32 %v1552, %v1618
        %v1628 = vadd.f32 %v1553, %v1619
        %v1629 = vadd.f32 %v1554, %v1620
        %v1630 = vadd.f32 %v1555, %v1621
        %v1631 = vadd.f32 %v1556, %v1622
        %v1632 = vadd.f32 %v1557, %v1623
        %v1633 = vadd.f32 %v1558, %v1624
        %v1634 = vadd.f32 %v1559, %v1625
        %v1635 = vadd.f32 %v1560, %v1626
        %v1636 = vstv %s195
        %v1637 = vmul.f32 %v1636, %v1600
        %v1638 = vmul.f32 %v1636, %v1602
        %v1639 = vmul.f32 %v1636, %v1604
        %v1640 = vmul.f32 %v1636, %v1606
        %v1641 = vmul.f32 %v1636, %v1608
        %v1642 = vmul.f32 %v1636, %v1610
        %v1643 = vmul.f32 %v1636, %v1612
        %v1644 = vmul.f32 %v1636, %v1614
        %v1645 = vmul.f32 %v1636, %v1616
        %v1646 = vadd.f32 %v1571, %v1637
        %v1647 = vadd.f32 %v1572, %v1638
        %v1648 = vadd.f32 %v1573, %v1639
        %v1649 = vadd.f32 %v1574, %v1640
        %v1650 = vadd.f32 %v1575, %v1641
        %v1651 = vadd.f32 %v1576, %v1642
        %v1652 = vadd.f32 %v1577, %v1643
        %v1653 = vadd.f32 %v1578, %v1644
        %v1654 = vadd.f32 %v1579, %v1645
        %v1655 = vstv %s207
        %v1656 = vmul.f32 %v1655, %v1600
        %v1657 = vmul.f32 %v1655, %v1602
        %v1658 = vmul.f32 %v1655, %v1604
        %v1659 = vmul.f32 %v1655, %v1606
        %v1660 = vmul.f32 %v1655, %v1608
        %v1661 = vmul.f32 %v1655, %v1610
        %v1662 = vmul.f32 %v1655, %v1612
        %v1663 = vmul.f32 %v1655, %v1614
        %v1664 = vmul.f32 %v1655, %v1616
        %v1665 = vadd.f32 %v1590, %v1656
        %v1666 = vadd.f32 %v1591, %v1657
        %v1667 = vadd.f32 %v1592, %v1658
        %v1668 = vadd.f32 %v1593, %v1659
        %v1669 = vadd.f32 %v1594, %v1660
        %v1670 = vadd.f32 %v1595, %v1661
        %v1671 = vadd.f32 %v1596, %v1662
        %v1672 = vadd.f32 %v1597, %v1663
        %v1673 = vadd.f32 %v1598, %v1664
        %v1674 = vld [vmem:[%s1318] sm:$0xff]
        %v1675 = vld [vmem:[%s1318 + $0x8] sm:$0xff]
        %v1676 = vld [vmem:[%s1318 + $0x10] sm:$0xff]
        %v1677 = vld [vmem:[%s1318 + $0x18] sm:$0xff]
        %v1678 = vld [vmem:[%s1318 + $0x20] sm:$0xff]
        %v1679 = vld [vmem:[%s1318 + $0x28] sm:$0xff]
        %v1680 = vld [vmem:[%s1318 + $0x30] sm:$0xff]
        %v1681 = vld [vmem:[%s1318 + $0x38] sm:$0xff]
        %v1682 = vld [vmem:[%s1318 + $0x40] sm:$0xff]
        %v1683 = vstv %s190
        %v1684 = vmul.f32 %v1683, %v1674
        %v1685 = vmul.f32 %v1683, %v1675
        %v1686 = vmul.f32 %v1683, %v1676
        %v1687 = vmul.f32 %v1683, %v1677
        %v1688 = vmul.f32 %v1683, %v1678
        %v1689 = vmul.f32 %v1683, %v1679
        %v1690 = vmul.f32 %v1683, %v1680
        %v1691 = vmul.f32 %v1683, %v1681
        %v1692 = vmul.f32 %v1683, %v1682
        %v1693 = vadd.f32 %v1627, %v1684
        %v1694 = vadd.f32 %v1628, %v1685
        %v1695 = vadd.f32 %v1629, %v1686
        %v1696 = vadd.f32 %v1630, %v1687
        %v1697 = vadd.f32 %v1631, %v1688
        %v1698 = vadd.f32 %v1632, %v1689
        %v1699 = vadd.f32 %v1633, %v1690
        %v1700 = vadd.f32 %v1634, %v1691
        %v1701 = vadd.f32 %v1635, %v1692
        %v1702 = vstv %s202
        %v1703 = vmul.f32 %v1702, %v1674
        %v1704 = vmul.f32 %v1702, %v1675
        %v1705 = vmul.f32 %v1702, %v1676
        %v1706 = vmul.f32 %v1702, %v1677
        %v1707 = vmul.f32 %v1702, %v1678
        %v1708 = vmul.f32 %v1702, %v1679
        %v1709 = vmul.f32 %v1702, %v1680
        %v1710 = vmul.f32 %v1702, %v1681
        %v1711 = vmul.f32 %v1702, %v1682
        %v1712 = vadd.f32 %v1646, %v1703
        %v1713 = vadd.f32 %v1647, %v1704
        %v1714 = vadd.f32 %v1648, %v1705
        %v1715 = vadd.f32 %v1649, %v1706
        %v1716 = vadd.f32 %v1650, %v1707
        %v1717 = vadd.f32 %v1651, %v1708
        %v1718 = vadd.f32 %v1652, %v1709
        %v1719 = vadd.f32 %v1653, %v1710
        %v1720 = vadd.f32 %v1654, %v1711
        %v1721 = vstv %s214
        %v1722 = vmul.f32 %v1721, %v1674
        %v1723 = vmul.f32 %v1721, %v1675
        %v1724 = vmul.f32 %v1721, %v1676
        %v1725 = vmul.f32 %v1721, %v1677
        %v1726 = vmul.f32 %v1721, %v1678
        %v1727 = vmul.f32 %v1721, %v1679
        %v1728 = vmul.f32 %v1721, %v1680
        %v1729 = vmul.f32 %v1721, %v1681
        %v1730 = vmul.f32 %v1721, %v1682
        %v1731 = vadd.f32 %v1665, %v1722
        %v1732 = vadd.f32 %v1666, %v1723
        %v1733 = vadd.f32 %v1667, %v1724
        %v1734 = vadd.f32 %v1668, %v1725
        %v1735 = vadd.f32 %v1669, %v1726
        %v1736 = vadd.f32 %v1670, %v1727
        %v1737 = vadd.f32 %v1671, %v1728
        %v1738 = vadd.f32 %v1672, %v1729
        %v1739 = vadd.f32 %v1673, %v1730
        %1740 = vrot.lane.b32.xlu0 %v1674, 1
        %v1741 = vpop.permute.xlu0 %1740
        %1742 = vrot.lane.b32.xlu0 %v1675, 1
        %v1743 = vpop.permute.xlu0 %1742
        %1744 = vrot.lane.b32.xlu0 %v1676, 1
        %v1745 = vpop.permute.xlu0 %1744
        %1746 = vrot.lane.b32.xlu0 %v1677, 1
        %v1747 = vpop.permute.xlu0 %1746
        %1748 = vrot.lane.b32.xlu0 %v1678, 1
        %v1749 = vpop.permute.xlu0 %1748
        %1750 = vrot.lane.b32.xlu0 %v1679, 1
        %v1751 = vpop.permute.xlu0 %1750
        %1752 = vrot.lane.b32.xlu0 %v1680, 1
        %v1753 = vpop.permute.xlu0 %1752
        %1754 = vrot.lane.b32.xlu0 %v1681, 1
        %v1755 = vpop.permute.xlu0 %1754
        %1756 = vrot.lane.b32.xlu0 %v1682, 1
        %v1757 = vpop.permute.xlu0 %1756
        %v1758 = vstv %s189
        %v1759 = vmul.f32 %v1758, %v1741
        %v1760 = vmul.f32 %v1758, %v1743
        %v1761 = vmul.f32 %v1758, %v1745
        %v1762 = vmul.f32 %v1758, %v1747
        %v1763 = vmul.f32 %v1758, %v1749
        %v1764 = vmul.f32 %v1758, %v1751
        %v1765 = vmul.f32 %v1758, %v1753
        %v1766 = vmul.f32 %v1758, %v1755
        %v1767 = vmul.f32 %v1758, %v1757
        %v1768 = vadd.f32 %v1693, %v1759
        %v1769 = vadd.f32 %v1694, %v1760
        %v1770 = vadd.f32 %v1695, %v1761
        %v1771 = vadd.f32 %v1696, %v1762
        %v1772 = vadd.f32 %v1697, %v1763
        %v1773 = vadd.f32 %v1698, %v1764
        %v1774 = vadd.f32 %v1699, %v1765
        %v1775 = vadd.f32 %v1700, %v1766
        %v1776 = vadd.f32 %v1701, %v1767
        %v1777 = vstv %s201
        %v1778 = vmul.f32 %v1777, %v1741
        %v1779 = vmul.f32 %v1777, %v1743
        %v1780 = vmul.f32 %v1777, %v1745
        %v1781 = vmul.f32 %v1777, %v1747
        %v1782 = vmul.f32 %v1777, %v1749
        %v1783 = vmul.f32 %v1777, %v1751
        %v1784 = vmul.f32 %v1777, %v1753
        %v1785 = vmul.f32 %v1777, %v1755
        %v1786 = vmul.f32 %v1777, %v1757
        %v1787 = vadd.f32 %v1712, %v1778
        %v1788 = vadd.f32 %v1713, %v1779
        %v1789 = vadd.f32 %v1714, %v1780
        %v1790 = vadd.f32 %v1715, %v1781
        %v1791 = vadd.f32 %v1716, %v1782
        %v1792 = vadd.f32 %v1717, %v1783
        %v1793 = vadd.f32 %v1718, %v1784
        %v1794 = vadd.f32 %v1719, %v1785
        %v1795 = vadd.f32 %v1720, %v1786
        %v1796 = vstv %s213
        %v1797 = vmul.f32 %v1796, %v1741
        %v1798 = vmul.f32 %v1796, %v1743
        %v1799 = vmul.f32 %v1796, %v1745
        %v1800 = vmul.f32 %v1796, %v1747
        %v1801 = vmul.f32 %v1796, %v1749
        %v1802 = vmul.f32 %v1796, %v1751
        %v1803 = vmul.f32 %v1796, %v1753
        %v1804 = vmul.f32 %v1796, %v1755
        %v1805 = vmul.f32 %v1796, %v1757
        %v1806 = vadd.f32 %v1731, %v1797
        %v1807 = vadd.f32 %v1732, %v1798
        %v1808 = vadd.f32 %v1733, %v1799
        %v1809 = vadd.f32 %v1734, %v1800
        %v1810 = vadd.f32 %v1735, %v1801
        %v1811 = vadd.f32 %v1736, %v1802
        %v1812 = vadd.f32 %v1737, %v1803
        %v1813 = vadd.f32 %v1738, %v1804
        %v1814 = vadd.f32 %v1739, %v1805
        %v1815 = vrot.slane %v1674, 7
        %v1816 = vrot.slane %v1675, 7
        %v1817 = vrot.slane %v1676, 7
        %v1818 = vrot.slane %v1677, 7
        %v1819 = vrot.slane %v1678, 7
        %v1820 = vrot.slane %v1679, 7
        %v1821 = vrot.slane %v1680, 7
        %v1822 = vrot.slane %v1681, 7
        %v1823 = vrot.slane %v1682, 7
        %v1824 = vsel %vm457, %v1822, %v1823
        %v1825 = vsel %vm457, %v1821, %v1822
        %v1826 = vsel %vm457, %v1820, %v1821
        %v1827 = vsel %vm457, %v1819, %v1820
        %v1828 = vsel %vm457, %v1818, %v1819
        %v1829 = vsel %vm457, %v1817, %v1818
        %v1830 = vsel %vm457, %v1816, %v1817
        %v1831 = vsel %vm457, %v1815, %v1816
        %v1832 = vsel %vm457, %v1823, %v1815
        %v1833 = vstv %s188
        %v1834 = vmul.f32 %v1833, %v1832
        %v1835 = vmul.f32 %v1833, %v1831
        %v1836 = vmul.f32 %v1833, %v1830
        %v1837 = vmul.f32 %v1833, %v1829
        %v1838 = vmul.f32 %v1833, %v1828
        %v1839 = vmul.f32 %v1833, %v1827
        %v1840 = vmul.f32 %v1833, %v1826
        %v1841 = vmul.f32 %v1833, %v1825
        %v1842 = vmul.f32 %v1833, %v1824
        %v1843 = vadd.f32 %v1768, %v1834
        %v1844 = vadd.f32 %v1769, %v1835
        %v1845 = vadd.f32 %v1770, %v1836
        %v1846 = vadd.f32 %v1771, %v1837
        %v1847 = vadd.f32 %v1772, %v1838
        %v1848 = vadd.f32 %v1773, %v1839
        %v1849 = vadd.f32 %v1774, %v1840
        %v1850 = vadd.f32 %v1775, %v1841
        %v1851 = vadd.f32 %v1776, %v1842
        %v1852 = vstv %s200
        %v1853 = vmul.f32 %v1852, %v1832
        %v1854 = vmul.f32 %v1852, %v1831
        %v1855 = vmul.f32 %v1852, %v1830
        %v1856 = vmul.f32 %v1852, %v1829
        %v1857 = vmul.f32 %v1852, %v1828
        %v1858 = vmul.f32 %v1852, %v1827
        %v1859 = vmul.f32 %v1852, %v1826
        %v1860 = vmul.f32 %v1852, %v1825
        %v1861 = vmul.f32 %v1852, %v1824
        %v1862 = vadd.f32 %v1787, %v1853
        %v1863 = vadd.f32 %v1788, %v1854
        %v1864 = vadd.f32 %v1789, %v1855
        %v1865 = vadd.f32 %v1790, %v1856
        %v1866 = vadd.f32 %v1791, %v1857
        %v1867 = vadd.f32 %v1792, %v1858
        %v1868 = vadd.f32 %v1793, %v1859
        %v1869 = vadd.f32 %v1794, %v1860
        %v1870 = vadd.f32 %v1795, %v1861
        %v1871 = vstv %s212
        %v1872 = vmul.f32 %v1871, %v1832
        %v1873 = vmul.f32 %v1871, %v1831
        %v1874 = vmul.f32 %v1871, %v1830
        %v1875 = vmul.f32 %v1871, %v1829
        %v1876 = vmul.f32 %v1871, %v1828
        %v1877 = vmul.f32 %v1871, %v1827
        %v1878 = vmul.f32 %v1871, %v1826
        %v1879 = vmul.f32 %v1871, %v1825
        %v1880 = vmul.f32 %v1871, %v1824
        %v1881 = vadd.f32 %v1806, %v1872
        %v1882 = vadd.f32 %v1807, %v1873
        %v1883 = vadd.f32 %v1808, %v1874
        %v1884 = vadd.f32 %v1809, %v1875
        %v1885 = vadd.f32 %v1810, %v1876
        %v1886 = vadd.f32 %v1811, %v1877
        %v1887 = vadd.f32 %v1812, %v1878
        %v1888 = vadd.f32 %v1813, %v1879
        %v1889 = vadd.f32 %v1814, %v1880
        %1890 = vrot.lane.b32.xlu0 %v1832, 1
        %v1891 = vpop.permute.xlu0 %1890
        %1892 = vrot.lane.b32.xlu0 %v1831, 1
        %v1893 = vpop.permute.xlu0 %1892
        %1894 = vrot.lane.b32.xlu0 %v1830, 1
        %v1895 = vpop.permute.xlu0 %1894
        %1896 = vrot.lane.b32.xlu0 %v1829, 1
        %v1897 = vpop.permute.xlu0 %1896
        %1898 = vrot.lane.b32.xlu0 %v1828, 1
        %v1899 = vpop.permute.xlu0 %1898
        %1900 = vrot.lane.b32.xlu0 %v1827, 1
        %v1901 = vpop.permute.xlu0 %1900
        %1902 = vrot.lane.b32.xlu0 %v1826, 1
        %v1903 = vpop.permute.xlu0 %1902
        %1904 = vrot.lane.b32.xlu0 %v1825, 1
        %v1905 = vpop.permute.xlu0 %1904
        %1906 = vrot.lane.b32.xlu0 %v1824, 1
        %v1907 = vpop.permute.xlu0 %1906
        %v1908 = vstv %s187
        %v1909 = vmul.f32 %v1908, %v1891
        %v1910 = vmul.f32 %v1908, %v1893
        %v1911 = vmul.f32 %v1908, %v1895
        %v1912 = vmul.f32 %v1908, %v1897
        %v1913 = vmul.f32 %v1908, %v1899
        %v1914 = vmul.f32 %v1908, %v1901
        %v1915 = vmul.f32 %v1908, %v1903
        %v1916 = vmul.f32 %v1908, %v1905
        %v1917 = vmul.f32 %v1908, %v1907
        %v1918 = vadd.f32 %v1843, %v1909
        %v1919 = vadd.f32 %v1844, %v1910
        %v1920 = vadd.f32 %v1845, %v1911
        %v1921 = vadd.f32 %v1846, %v1912
        %v1922 = vadd.f32 %v1847, %v1913
        %v1923 = vadd.f32 %v1848, %v1914
        %v1924 = vadd.f32 %v1849, %v1915
        %v1925 = vadd.f32 %v1850, %v1916
        %v1926 = vadd.f32 %v1851, %v1917
        %v1927 = vstv %s199
        %v1928 = vmul.f32 %v1927, %v1891
        %v1929 = vmul.f32 %v1927, %v1893
        %v1930 = vmul.f32 %v1927, %v1895
        %v1931 = vmul.f32 %v1927, %v1897
        %v1932 = vmul.f32 %v1927, %v1899
        %v1933 = vmul.f32 %v1927, %v1901
        %v1934 = vmul.f32 %v1927, %v1903
        %v1935 = vmul.f32 %v1927, %v1905
        %v1936 = vmul.f32 %v1927, %v1907
        %v1937 = vadd.f32 %v1862, %v1928
        %v1938 = vadd.f32 %v1863, %v1929
        %v1939 = vadd.f32 %v1864, %v1930
        %v1940 = vadd.f32 %v1865, %v1931
        %v1941 = vadd.f32 %v1866, %v1932
        %v1942 = vadd.f32 %v1867, %v1933
        %v1943 = vadd.f32 %v1868, %v1934
        %v1944 = vadd.f32 %v1869, %v1935
        %v1945 = vadd.f32 %v1870, %v1936
        %v1946 = vstv %s211
        %v1947 = vmul.f32 %v1946, %v1891
        %v1948 = vmul.f32 %v1946, %v1893
        %v1949 = vmul.f32 %v1946, %v1895
        %v1950 = vmul.f32 %v1946, %v1897
        %v1951 = vmul.f32 %v1946, %v1899
        %v1952 = vmul.f32 %v1946, %v1901
        %v1953 = vmul.f32 %v1946, %v1903
        %v1954 = vmul.f32 %v1946, %v1905
        %v1955 = vmul.f32 %v1946, %v1907
        %v1956 = vadd.f32 %v1881, %v1947
        %v1957 = vadd.f32 %v1882, %v1948
        %v1958 = vadd.f32 %v1883, %v1949
        %v1959 = vadd.f32 %v1884, %v1950
        %v1960 = vadd.f32 %v1885, %v1951
        %v1961 = vadd.f32 %v1886, %v1952
        %v1962 = vadd.f32 %v1887, %v1953
        %v1963 = vadd.f32 %v1888, %v1954
        %v1964 = vadd.f32 %v1889, %v1955
        %v1965 = vld [vmem:[%s1373] sm:$0xff]
        %v1966 = vld [vmem:[%s1373 + $0x8] sm:$0xff]
        %v1967 = vld [vmem:[%s1373 + $0x10] sm:$0xff]
        %v1968 = vld [vmem:[%s1373 + $0x18] sm:$0xff]
        %v1969 = vld [vmem:[%s1373 + $0x20] sm:$0xff]
        %v1970 = vld [vmem:[%s1373 + $0x28] sm:$0xff]
        %v1971 = vld [vmem:[%s1373 + $0x30] sm:$0xff]
        %v1972 = vld [vmem:[%s1373 + $0x38] sm:$0xff]
        %v1973 = vld [vmem:[%s1373 + $0x40] sm:$0xff]
        %v1974 = vstv %s194
        %v1975 = vmul.f32 %v1974, %v1965
        %v1976 = vmul.f32 %v1974, %v1966
        %v1977 = vmul.f32 %v1974, %v1967
        %v1978 = vmul.f32 %v1974, %v1968
        %v1979 = vmul.f32 %v1974, %v1969
        %v1980 = vmul.f32 %v1974, %v1970
        %v1981 = vmul.f32 %v1974, %v1971
        %v1982 = vmul.f32 %v1974, %v1972
        %v1983 = vmul.f32 %v1974, %v1973
        %v1984 = vadd.f32 %v1918, %v1975
        %v1985 = vadd.f32 %v1919, %v1976
        %v1986 = vadd.f32 %v1920, %v1977
        %v1987 = vadd.f32 %v1921, %v1978
        %v1988 = vadd.f32 %v1922, %v1979
        %v1989 = vadd.f32 %v1923, %v1980
        %v1990 = vadd.f32 %v1924, %v1981
        %v1991 = vadd.f32 %v1925, %v1982
        %v1992 = vadd.f32 %v1926, %v1983
        %v1993 = vstv %s206
        %v1994 = vmul.f32 %v1993, %v1965
        %v1995 = vmul.f32 %v1993, %v1966
        %v1996 = vmul.f32 %v1993, %v1967
        %v1997 = vmul.f32 %v1993, %v1968
        %v1998 = vmul.f32 %v1993, %v1969
        %v1999 = vmul.f32 %v1993, %v1970
        %v2000 = vmul.f32 %v1993, %v1971
        %v2001 = vmul.f32 %v1993, %v1972
        %v2002 = vmul.f32 %v1993, %v1973
        %v2003 = vadd.f32 %v1937, %v1994
        %v2004 = vadd.f32 %v1938, %v1995
        %v2005 = vadd.f32 %v1939, %v1996
        %v2006 = vadd.f32 %v1940, %v1997
        %v2007 = vadd.f32 %v1941, %v1998
        %v2008 = vadd.f32 %v1942, %v1999
        %v2009 = vadd.f32 %v1943, %v2000
        %v2010 = vadd.f32 %v1944, %v2001
        %v2011 = vadd.f32 %v1945, %v2002
        %v2012 = vstv %s218
        %v2013 = vmul.f32 %v2012, %v1965
        %v2014 = vmul.f32 %v2012, %v1966
        %v2015 = vmul.f32 %v2012, %v1967
        %v2016 = vmul.f32 %v2012, %v1968
        %v2017 = vmul.f32 %v2012, %v1969
        %v2018 = vmul.f32 %v2012, %v1970
        %v2019 = vmul.f32 %v2012, %v1971
        %v2020 = vmul.f32 %v2012, %v1972
        %v2021 = vmul.f32 %v2012, %v1973
        %v2022 = vadd.f32 %v1956, %v2013
        %v2023 = vadd.f32 %v1957, %v2014
        %v2024 = vadd.f32 %v1958, %v2015
        %v2025 = vadd.f32 %v1959, %v2016
        %v2026 = vadd.f32 %v1960, %v2017
        %v2027 = vadd.f32 %v1961, %v2018
        %v2028 = vadd.f32 %v1962, %v2019
        %v2029 = vadd.f32 %v1963, %v2020
        %v2030 = vadd.f32 %v1964, %v2021
        %2031 = vrot.lane.b32.xlu0 %v1965, 1
        %v2032 = vpop.permute.xlu0 %2031
        %2033 = vrot.lane.b32.xlu0 %v1966, 1
        %v2034 = vpop.permute.xlu0 %2033
        %2035 = vrot.lane.b32.xlu0 %v1967, 1
        %v2036 = vpop.permute.xlu0 %2035
        %2037 = vrot.lane.b32.xlu0 %v1968, 1
        %v2038 = vpop.permute.xlu0 %2037
        %2039 = vrot.lane.b32.xlu0 %v1969, 1
        %v2040 = vpop.permute.xlu0 %2039
        %2041 = vrot.lane.b32.xlu0 %v1970, 1
        %v2042 = vpop.permute.xlu0 %2041
        %2043 = vrot.lane.b32.xlu0 %v1971, 1
        %v2044 = vpop.permute.xlu0 %2043
        %2045 = vrot.lane.b32.xlu0 %v1972, 1
        %v2046 = vpop.permute.xlu0 %2045
        %2047 = vrot.lane.b32.xlu0 %v1973, 1
        %v2048 = vpop.permute.xlu0 %2047
        %v2049 = vstv %s193
        %v2050 = vmul.f32 %v2049, %v2032
        %v2051 = vmul.f32 %v2049, %v2034
        %v2052 = vmul.f32 %v2049, %v2036
        %v2053 = vmul.f32 %v2049, %v2038
        %v2054 = vmul.f32 %v2049, %v2040
        %v2055 = vmul.f32 %v2049, %v2042
        %v2056 = vmul.f32 %v2049, %v2044
        %v2057 = vmul.f32 %v2049, %v2046
        %v2058 = vmul.f32 %v2049, %v2048
        %v2059 = vadd.f32 %v1984, %v2050
        %v2060 = vadd.f32 %v1985, %v2051
        %v2061 = vadd.f32 %v1986, %v2052
        %v2062 = vadd.f32 %v1987, %v2053
        %v2063 = vadd.f32 %v1988, %v2054
        %v2064 = vadd.f32 %v1989, %v2055
        %v2065 = vadd.f32 %v1990, %v2056
        %v2066 = vadd.f32 %v1991, %v2057
        %v2067 = vadd.f32 %v1992, %v2058
        %v2068 = vstv %s205
        %v2069 = vmul.f32 %v2068, %v2032
        %v2070 = vmul.f32 %v2068, %v2034
        %v2071 = vmul.f32 %v2068, %v2036
        %v2072 = vmul.f32 %v2068, %v2038
        %v2073 = vmul.f32 %v2068, %v2040
        %v2074 = vmul.f32 %v2068, %v2042
        %v2075 = vmul.f32 %v2068, %v2044
        %v2076 = vmul.f32 %v2068, %v2046
        %v2077 = vmul.f32 %v2068, %v2048
        %v2078 = vadd.f32 %v2003, %v2069
        %v2079 = vadd.f32 %v2004, %v2070
        %v2080 = vadd.f32 %v2005, %v2071
        %v2081 = vadd.f32 %v2006, %v2072
        %v2082 = vadd.f32 %v2007, %v2073
        %v2083 = vadd.f32 %v2008, %v2074
        %v2084 = vadd.f32 %v2009, %v2075
        %v2085 = vadd.f32 %v2010, %v2076
        %v2086 = vadd.f32 %v2011, %v2077
        %v2087 = vstv %s217
        %v2088 = vmul.f32 %v2087, %v2032
        %v2089 = vmul.f32 %v2087, %v2034
        %v2090 = vmul.f32 %v2087, %v2036
        %v2091 = vmul.f32 %v2087, %v2038
        %v2092 = vmul.f32 %v2087, %v2040
        %v2093 = vmul.f32 %v2087, %v2042
        %v2094 = vmul.f32 %v2087, %v2044
        %v2095 = vmul.f32 %v2087, %v2046
        %v2096 = vmul.f32 %v2087, %v2048
        %v2097 = vadd.f32 %v2022, %v2088
        %v2098 = vadd.f32 %v2023, %v2089
        %v2099 = vadd.f32 %v2024, %v2090
        %v2100 = vadd.f32 %v2025, %v2091
        %v2101 = vadd.f32 %v2026, %v2092
        %v2102 = vadd.f32 %v2027, %v2093
        %v2103 = vadd.f32 %v2028, %v2094
        %v2104 = vadd.f32 %v2029, %v2095
        %v2105 = vadd.f32 %v2030, %v2096
        %v2106 = vrot.slane %v1965, 7
        %v2107 = vrot.slane %v1966, 7
        %v2108 = vrot.slane %v1967, 7
        %v2109 = vrot.slane %v1968, 7
        %v2110 = vrot.slane %v1969, 7
        %v2111 = vrot.slane %v1970, 7
        %v2112 = vrot.slane %v1971, 7
        %v2113 = vrot.slane %v1972, 7
        %v2114 = vrot.slane %v1973, 7
        %v2115 = vsel %vm457, %v2113, %v2114
        %v2116 = vsel %vm457, %v2112, %v2113
        %v2117 = vsel %vm457, %v2111, %v2112
        %v2118 = vsel %vm457, %v2110, %v2111
        %v2119 = vsel %vm457, %v2109, %v2110
        %v2120 = vsel %vm457, %v2108, %v2109
        %v2121 = vsel %vm457, %v2107, %v2108
        %v2122 = vsel %vm457, %v2106, %v2107
        %v2123 = vsel %vm457, %v2114, %v2106
        %v2124 = vstv %s192
        %v2125 = vmul.f32 %v2124, %v2123
        %v2126 = vmul.f32 %v2124, %v2122
        %v2127 = vmul.f32 %v2124, %v2121
        %v2128 = vmul.f32 %v2124, %v2120
        %v2129 = vmul.f32 %v2124, %v2119
        %v2130 = vmul.f32 %v2124, %v2118
        %v2131 = vmul.f32 %v2124, %v2117
        %v2132 = vmul.f32 %v2124, %v2116
        %v2133 = vmul.f32 %v2124, %v2115
        %v2134 = vadd.f32 %v2059, %v2125
        %v2135 = vadd.f32 %v2060, %v2126
        %v2136 = vadd.f32 %v2061, %v2127
        %v2137 = vadd.f32 %v2062, %v2128
        %v2138 = vadd.f32 %v2063, %v2129
        %v2139 = vadd.f32 %v2064, %v2130
        %v2140 = vadd.f32 %v2065, %v2131
        %v2141 = vadd.f32 %v2066, %v2132
        %v2142 = vadd.f32 %v2067, %v2133
        %v2143 = vstv %s204
        %v2144 = vmul.f32 %v2143, %v2123
        %v2145 = vmul.f32 %v2143, %v2122
        %v2146 = vmul.f32 %v2143, %v2121
        %v2147 = vmul.f32 %v2143, %v2120
        %v2148 = vmul.f32 %v2143, %v2119
        %v2149 = vmul.f32 %v2143, %v2118
        %v2150 = vmul.f32 %v2143, %v2117
        %v2151 = vmul.f32 %v2143, %v2116
        %v2152 = vmul.f32 %v2143, %v2115
        %v2153 = vadd.f32 %v2078, %v2144
        %v2154 = vadd.f32 %v2079, %v2145
        %v2155 = vadd.f32 %v2080, %v2146
        %v2156 = vadd.f32 %v2081, %v2147
        %v2157 = vadd.f32 %v2082, %v2148
        %v2158 = vadd.f32 %v2083, %v2149
        %v2159 = vadd.f32 %v2084, %v2150
        %v2160 = vadd.f32 %v2085, %v2151
        %v2161 = vadd.f32 %v2086, %v2152
        %v2162 = vstv %s216
        %v2163 = vmul.f32 %v2162, %v2123
        %v2164 = vmul.f32 %v2162, %v2122
        %v2165 = vmul.f32 %v2162, %v2121
        %v2166 = vmul.f32 %v2162, %v2120
        %v2167 = vmul.f32 %v2162, %v2119
        %v2168 = vmul.f32 %v2162, %v2118
        %v2169 = vmul.f32 %v2162, %v2117
        %v2170 = vmul.f32 %v2162, %v2116
        %v2171 = vmul.f32 %v2162, %v2115
        %v2172 = vadd.f32 %v2097, %v2163
        %v2173 = vadd.f32 %v2098, %v2164
        %v2174 = vadd.f32 %v2099, %v2165
        %v2175 = vadd.f32 %v2100, %v2166
        %v2176 = vadd.f32 %v2101, %v2167
        %v2177 = vadd.f32 %v2102, %v2168
        %v2178 = vadd.f32 %v2103, %v2169
        %v2179 = vadd.f32 %v2104, %v2170
        %v2180 = vadd.f32 %v2105, %v2171
        %2181 = vrot.lane.b32.xlu0 %v2123, 1
        %v2182 = vpop.permute.xlu0 %2181
        %2183 = vrot.lane.b32.xlu0 %v2122, 1
        %v2184 = vpop.permute.xlu0 %2183
        %2185 = vrot.lane.b32.xlu0 %v2121, 1
        %v2186 = vpop.permute.xlu0 %2185
        %2187 = vrot.lane.b32.xlu0 %v2120, 1
        %v2188 = vpop.permute.xlu0 %2187
        %2189 = vrot.lane.b32.xlu0 %v2119, 1
        %v2190 = vpop.permute.xlu0 %2189
        %2191 = vrot.lane.b32.xlu0 %v2118, 1
        %v2192 = vpop.permute.xlu0 %2191
        %2193 = vrot.lane.b32.xlu0 %v2117, 1
        %v2194 = vpop.permute.xlu0 %2193
        %2195 = vrot.lane.b32.xlu0 %v2116, 1
        %v2196 = vpop.permute.xlu0 %2195
        %2197 = vrot.lane.b32.xlu0 %v2115, 1
        %v2198 = vpop.permute.xlu0 %2197
        %v2199 = vstv %s191
        %v2200 = vmul.f32 %v2199, %v2182
        %v2201 = vmul.f32 %v2199, %v2184
        %v2202 = vmul.f32 %v2199, %v2186
        %v2203 = vmul.f32 %v2199, %v2188
        %v2204 = vmul.f32 %v2199, %v2190
        %v2205 = vmul.f32 %v2199, %v2192
        %v2206 = vmul.f32 %v2199, %v2194
        %v2207 = vmul.f32 %v2199, %v2196
        %v2208 = vmul.f32 %v2199, %v2198
        %v2209 = vadd.f32 %v2134, %v2200
        %v2210 = vadd.f32 %v2135, %v2201
        %v2211 = vadd.f32 %v2136, %v2202
        %v2212 = vadd.f32 %v2137, %v2203
        %v2213 = vadd.f32 %v2138, %v2204
        %v2214 = vadd.f32 %v2139, %v2205
        %v2215 = vadd.f32 %v2140, %v2206
        %v2216 = vadd.f32 %v2141, %v2207
        %v2217 = vadd.f32 %v2142, %v2208
        %v2218 = vstv %s203
        %v2219 = vmul.f32 %v2218, %v2182
        %v2220 = vmul.f32 %v2218, %v2184
        %v2221 = vmul.f32 %v2218, %v2186
        %v2222 = vmul.f32 %v2218, %v2188
        %v2223 = vmul.f32 %v2218, %v2190
        %v2224 = vmul.f32 %v2218, %v2192
        %v2225 = vmul.f32 %v2218, %v2194
        %v2226 = vmul.f32 %v2218, %v2196
        %v2227 = vmul.f32 %v2218, %v2198
        %v2228 = vadd.f32 %v2153, %v2219
        %v2229 = vadd.f32 %v2154, %v2220
        %v2230 = vadd.f32 %v2155, %v2221
        %v2231 = vadd.f32 %v2156, %v2222
        %v2232 = vadd.f32 %v2157, %v2223
        %v2233 = vadd.f32 %v2158, %v2224
        %v2234 = vadd.f32 %v2159, %v2225
        %v2235 = vadd.f32 %v2160, %v2226
        %v2236 = vadd.f32 %v2161, %v2227
        %v2237 = vstv %s215
        %v2238 = vmul.f32 %v2237, %v2182
        %v2239 = vmul.f32 %v2237, %v2184
        %v2240 = vmul.f32 %v2237, %v2186
        %v2241 = vmul.f32 %v2237, %v2188
        %v2242 = vmul.f32 %v2237, %v2190
        %v2243 = vmul.f32 %v2237, %v2192
        %v2244 = vmul.f32 %v2237, %v2194
        %v2245 = vmul.f32 %v2237, %v2196
        %v2246 = vmul.f32 %v2237, %v2198
        %v2247 = vadd.f32 %v2172, %v2238
        %v2248 = vadd.f32 %v2173, %v2239
        %v2249 = vadd.f32 %v2174, %v2240
        %v2250 = vadd.f32 %v2175, %v2241
        %v2251 = vadd.f32 %v2176, %v2242
        %v2252 = vadd.f32 %v2177, %v2243
        %v2253 = vadd.f32 %v2178, %v2244
        %v2254 = vadd.f32 %v2179, %v2245
        %v2255 = vadd.f32 %v2180, %v2246
        %vm2256 = vcmask 539648
        %2257 = vst.msk [vmem:[%s146] sm:$0xff] %vm2256, %v2209
        %2258 = vst.msk [vmem:[%s146 + $0x8] sm:$0xff] %vm2256, %v2210
        %2259 = vst.msk [vmem:[%s146 + $0x10] sm:$0xff] %vm2256, %v2211
        %2260 = vst.msk [vmem:[%s146 + $0x18] sm:$0xff] %vm2256, %v2212
        %2261 = vst.msk [vmem:[%s146 + $0x20] sm:$0xff] %vm2256, %v2213
        %2262 = vst.msk [vmem:[%s146 + $0x28] sm:$0xff] %vm2256, %v2214
        %2263 = vst.msk [vmem:[%s146 + $0x30] sm:$0xff] %vm2256, %v2215
        %2264 = vst.msk [vmem:[%s146 + $0x38] sm:$0xff] %vm2256, %v2216
        %vm2265 = vcmask 533504
        %2266 = vst.msk [vmem:[%s146 + $0x40] sm:$0x3] %vm2265, %v2217
        %s2267 = scalar_lea.vmem %s146, 72
        %2268 = vst.msk [vmem:[%s2267] sm:$0xff] %vm2256, %v2228
        %2269 = vst.msk [vmem:[%s2267 + $0x8] sm:$0xff] %vm2256, %v2229
        %2270 = vst.msk [vmem:[%s2267 + $0x10] sm:$0xff] %vm2256, %v2230
        %2271 = vst.msk [vmem:[%s2267 + $0x18] sm:$0xff] %vm2256, %v2231
        %2272 = vst.msk [vmem:[%s2267 + $0x20] sm:$0xff] %vm2256, %v2232
        %2273 = vst.msk [vmem:[%s2267 + $0x28] sm:$0xff] %vm2256, %v2233
        %2274 = vst.msk [vmem:[%s2267 + $0x30] sm:$0xff] %vm2256, %v2234
        %2275 = vst.msk [vmem:[%s2267 + $0x38] sm:$0xff] %vm2256, %v2235
        %2276 = vst.msk [vmem:[%s2267 + $0x40] sm:$0x3] %vm2265, %v2236
        %s2277 = scalar_lea.vmem %s146, 144
        %2278 = vst.msk [vmem:[%s2277] sm:$0xff] %vm2256, %v2247
        %2279 = vst.msk [vmem:[%s2277 + $0x8] sm:$0xff] %vm2256, %v2248
        %2280 = vst.msk [vmem:[%s2277 + $0x10] sm:$0xff] %vm2256, %v2249
        %2281 = vst.msk [vmem:[%s2277 + $0x18] sm:$0xff] %vm2256, %v2250
        %2282 = vst.msk [vmem:[%s2277 + $0x20] sm:$0xff] %vm2256, %v2251
        %2283 = vst.msk [vmem:[%s2277 + $0x28] sm:$0xff] %vm2256, %v2252
        %2284 = vst.msk [vmem:[%s2277 + $0x30] sm:$0xff] %vm2256, %v2253
        %2285 = vst.msk [vmem:[%s2277 + $0x38] sm:$0xff] %vm2256, %v2254
        %2286 = vst.msk [vmem:[%s2277 + $0x40] sm:$0x3] %vm2265, %v2255
        %p2287 = scmp.lt.s32.totalorder %s25, 1
        %s2288 = scalar_select %p2287, %s25, 1
        %s2289 = smul.addr %s2288, 27
        %s2290 = smul.addr %s2289, 8
        %s2291 = scalar_lea.vmem %s3, %s2290
        // Predicated region
        $region29: #{tpu_custom_call.1} parent=23 // pred_check
          %p2292 = pneg %p69
        $region30: #{tpu_custom_call.1} parent=23 // pred_check_branch
          %2294 = sbr.rel (%p2292) target = $region32
        $region31: #{tpu_custom_call.1} parent=23 // pred_region
          _
        $region32: #{tpu_custom_call.1} parent=23 // pred_fallthru
          _
      $region24: #{tpu_custom_call.1} parent=5 // pred_fallthru
        _
      %p2295 = scmp.le.s32.totalorder 2, %s20
      // Predicated region
      $region33: #{tpu_custom_call.1} parent=5 // pred_check
        %p2296 = pneg %p2295
      $region34: #{tpu_custom_call.1} parent=5 // pred_check_branch
        %2298 = sbr.rel (%p2296) target = $region36
      $region35: #{tpu_custom_call.1} parent=5 // pred_region
        %s2299 = ssub.s32 %s20, 2
        // Predicated region
        $region37: #{tpu_custom_call.1} parent=35 // pred_check
          %p2300 = pneg %p75
        $region38: #{tpu_custom_call.1} parent=35 // pred_check_branch
          %2302 = sbr.rel (%p2300) target = $region40
        $region39: #{tpu_custom_call.1} parent=35 // pred_region
          %p2303 = scmp.lt.s32.totalorder %s26, 1
          %s2304 = scalar_select %p2303, %s26, 1
          %s2305 = smul.addr %s2304, 27
          %s2306 = smul.addr %s2305, 8
          %s2307 = scalar_lea.vmem %s3, %s2306
        $region40: #{tpu_custom_call.1} parent=35 // pred_fallthru
          _
      $region36: #{tpu_custom_call.1} parent=5 // pred_fallthru
        _
    $region6: #{tpu_custom_call.1} parent=1 // loop_footer
      %s24 = sadd.s32 1, %s20
    $region7: #{tpu_custom_call.1} parent=1 // loop_footer_branch
      %19 = sbr.rel target = $region3
    $region8: #{tpu_custom_call.1} parent=1 // loop_exit
      _
    %2308 = vsyncpa [#allocation8], 1
    %s2309 = scalar_lea.sflag [#allocation8], 1
    %2310 = vsyncpa %s2309, 1

</llo_original>
